<compile_context>
chip_gen: v7x
topology: tpu7x:2x2x1
jax: 0.10.0
libtpu: 0.0.40
codegen_flags: <defaults>
</compile_context>

<pallas_src>
import functools

import jax
import jax.numpy as jnp
from jax.experimental import pallas as pl
from jax.experimental.pallas import tpu as pltpu

_LANE = 128        # TPU lane width (last dim)
_SUBLANE = 8       # TPU sublane width (second-to-last dim, f32)
_MAX_BLOCK_B = 2048


def _round_up(x, m):
    return ((x + m - 1) // m) * m


def _pad2(a, rows, cols):
    """Zero-pad a 2-D array up to (rows, cols); no-op if already that shape."""
    pr, pc = rows - a.shape[0], cols - a.shape[1]
    if pr == 0 and pc == 0:
        return a
    return jnp.pad(a, ((0, pr), (0, pc)))


def prepare_params(params):
    """One-time lane-alignment of weights/biases (hoisted out of forward).

    Zero padding is mathematically a no-op: padded input columns hit zero
    weight rows, padded output columns get zero weights/biases.
    Returns (padded_params, meta) where meta holds the true layer dims.
    """
    in_dim, h1 = params["w1"].shape
    h2 = params["w2"].shape[1]
    out_dim = params["w3"].shape[1]
    in_p = _round_up(in_dim, _LANE)
    h1_p = _round_up(h1, _LANE)
    h2_p = _round_up(h2, _LANE)
    out_p = _round_up(out_dim, _LANE)

    prepared = {
        "w1": _pad2(params["w1"], in_p, h1_p),
        "b1": _pad2(params["b1"], 1, h1_p),
        "w2": _pad2(params["w2"], h1_p, h2_p),
        "b2": _pad2(params["b2"], 1, h2_p),
        "w3": _pad2(params["w3"], h2_p, out_p),
        "b3": _pad2(params["b3"], 1, out_p),
    }
    meta = {"h1": h1, "h2": h2, "out_dim": out_dim}
    return prepared, meta


def _resident_spec(shape):
    """Constant-index, VMEM-resident block; single buffer when supported."""
    index_map = lambda i: (0, 0)
    try:
        return pl.BlockSpec(shape, index_map, pipeline_mode=pl.Buffered(1))
    except (TypeError, AttributeError):
        return pl.BlockSpec(shape, index_map)


def _mlp_kernel(x_ref, w1_ref, b1_ref, w2_ref, b2_ref, w3_ref, b3_ref, out_ref):
    """Fused 3-layer MLP: relu(relu(x @ W1 + b1) @ W2 + b2) @ W3 + b3."""
    hi = jax.lax.Precision.HIGHEST
    x = x_ref[...]
    h = jnp.dot(x, w1_ref[...], preferred_element_type=jnp.float32,
                precision=hi) + b1_ref[...]
    h = jnp.maximum(h, 0.0)                                      # ReLU
    h = jnp.dot(h, w2_ref[...], preferred_element_type=jnp.float32,
                precision=hi) + b2_ref[...]
    h = jnp.maximum(h, 0.0)                                      # ReLU
    logits = jnp.dot(h, w3_ref[...], preferred_element_type=jnp.float32,
                     precision=hi) + b3_ref[...]
    out_ref[...] = logits.astype(out_ref.dtype)


@functools.partial(jax.jit, static_argnames=("h1", "h2", "out_dim"))
def neural_net_forward(x, prepared, *, h1, h2, out_dim):
    """Pallas-backed forward of NeuralNet.feedfwd.

    x: (B, in_dim) float32 (unpadded)
    prepared: output of prepare_params() — already 128-lane aligned
    h1, h2, out_dim: true (unpadded) layer widths (static)
    """
    B, in_dim = x.shape
    in_p, h1_p = prepared["w1"].shape
    h2_p = prepared["w2"].shape[1]
    out_p = prepared["w3"].shape[1]

    # --- batch tiling (static at trace time) ------------------------------
    # Single grid step whenever the batch fits the cap: the grid is a serial
    # loop on v5e/v6e, and for small per-step work megacore sharding on v7x
    # costs more (per-core launch + per-core weight DMA) than it saves.
    block_b = min(_round_up(max(B, _SUBLANE), _SUBLANE), _MAX_BLOCK_B)
    B_pad = _round_up(max(B, _SUBLANE), block_b)
    grid = (B_pad // block_b,)

    # Only x is padded per call (weights were padded once in prepare_params).
    x_p = x
    if B_pad != B or in_p != in_dim:
        x_p = jnp.pad(x, ((0, B_pad - B), (0, in_p - in_dim)))

    # Batch is tiled over the grid; weights/biases are full, constant-index,
    # single-buffered resident blocks (loaded once, reused every step).
    in_specs = [
        pl.BlockSpec((block_b, in_p), lambda i: (i, 0)),    # x tile
        _resident_spec((in_p, h1_p)),                       # w1
        _resident_spec((1, h1_p)),                          # b1
        _resident_spec((h1_p, h2_p)),                       # w2
        _resident_spec((1, h2_p)),                          # b2
        _resident_spec((h2_p, out_p)),                      # w3
        _resident_spec((1, out_p)),                         # b3
    ]
    out_spec = pl.BlockSpec((block_b, out_p), lambda i: (i, 0))

    # Honest cost estimate from the TRUE dims (padding is not real work).
    flops = 2 * B * (in_dim * h1 + h1 * h2 + h2 * out_dim)
    bytes_accessed = 4 * (
        B * in_dim + B * out_dim                      # activations in/out
        + in_dim * h1 + h1 * h2 + h2 * out_dim        # weights
        + h1 + h2 + out_dim                           # biases
    )

    # Resident VMEM budget: single-buffered weights + double-buffered x/out.
    weight_bytes = 4 * (in_p * h1_p + h1_p * h2_p + h2_p * out_p
                        + h1_p + h2_p + out_p)
    act_bytes = 2 * 4 * block_b * (in_p + out_p)
    vmem_need = weight_bytes + act_bytes
    compiler_kwargs = dict(dimension_semantics=("parallel",))
    if vmem_need > (28 << 20):
        # TODO(synk): for hidden widths >~2K, K-tile the weights over a second
        # ("arbitrary") grid axis instead of raising the scoped limit (v7x has
        # only 64 MiB physical VMEM per TensorCore).
        compiler_kwargs["vmem_limit_bytes"] = min(64 << 20, vmem_need + (4 << 20))

    out_padded = pl.pallas_call(
        _mlp_kernel,
        out_shape=jax.ShapeDtypeStruct((B_pad, out_p), x.dtype),
        grid_spec=pltpu.PrefetchScalarGridSpec(
            num_scalar_prefetch=0,
            grid=grid,
            in_specs=in_specs,
            out_specs=out_spec,
        ),
        compiler_params=pltpu.CompilerParams(**compiler_kwargs),
        cost_estimate=pl.CostEstimate(
            flops=flops, transcendentals=0, bytes_accessed=bytes_accessed),
    )(x_p, prepared["w1"], prepared["b1"], prepared["w2"], prepared["b2"],
      prepared["w3"], prepared["b3"])

    return out_padded[:B, :out_dim]


def init_params(key, in_dim, hid_layers, out_dim):
    """Deterministic init mimicking torch.nn.Linear default (U[-1/sqrt(fan_in), +])."""
    dims = [in_dim] + list(hid_layers) + [out_dim]
    params = {}
    for idx, (fan_in, fan_out) in enumerate(zip(dims[:-1], dims[1:]), start=1):
        key, kw, kb = jax.random.split(key, 3)
        bound = 1.0 / jnp.sqrt(jnp.float32(fan_in))
        params[f"w{idx}"] = jax.random.uniform(
            kw, (fan_in, fan_out), jnp.float32, -bound, bound)
        params[f"b{idx}"] = jax.random.uniform(
            kb, (1, fan_out), jnp.float32, -bound, bound)
    return params


def reference_forward(x, params):
    """Pure-JAX reference for correctness check."""
    h = jnp.maximum(x @ params["w1"] + params["b1"], 0.0)
    h = jnp.maximum(h @ params["w2"] + params["b2"], 0.0)
    return h @ params["w3"] + params["b3"]


if __name__ == "__main__":
    # Small config consistent with the module:
    #   state_shape = (16,)  -> in_dim = 16
    #   hid_layers  = [32, 32]
    #   action_space = 'disc', net_type = 'actor', env.action_space.n = 4
    B, IN_DIM, HID, OUT = 8, 16, (32, 32), 4

    key = jax.random.PRNGKey(0)
    key, kx = jax.random.split(key)
    x = jax.random.normal(kx, (B, IN_DIM), jnp.float32)
    params = init_params(key, IN_DIM, HID, OUT)

    # One-time weight/bias padding (hoisted out of the per-forward path).
    prepared, meta = prepare_params(params)
    prepared = jax.tree_util.tree_map(jax.block_until_ready, prepared)

    # TODO(synk): the Ordinal latent_layer is defined but never used in
    # NeuralNet.forward (only feedfwd is called), so it is not implemented here.

    logits = neural_net_forward(x, prepared, **meta)
    jax.block_until_ready(logits)
    ref = reference_forward(x, params)
    assert logits.shape == (B, OUT)
    assert jnp.allclose(logits, ref, atol=1e-5, rtol=1e-5)

    # Ragged, larger batch exercises wrapper-side x padding (single grid step).
    key, kx2 = jax.random.split(key)
    x2 = jax.random.normal(kx2, (50, IN_DIM), jnp.float32)
    logits2 = neural_net_forward(x2, prepared, **meta)
    jax.block_until_ready(logits2)
    assert logits2.shape == (50, OUT)
    assert jnp.allclose(logits2, reference_forward(x2, params), atol=1e-5, rtol=1e-5)

    print("KERNEL_OK")
</pallas_src>

<mosaic_0001>
module attributes {stable_mosaic.version = 11 : i64} {
  func.func @_mlp_kernel(%arg0: i32, %arg1: memref<8x128xf32, #tpu.memory_space<vmem>>, %arg2: memref<128x128xf32, #tpu.memory_space<vmem>>, %arg3: memref<1x128xf32, #tpu.memory_space<vmem>>, %arg4: memref<128x128xf32, #tpu.memory_space<vmem>>, %arg5: memref<1x128xf32, #tpu.memory_space<vmem>>, %arg6: memref<128x128xf32, #tpu.memory_space<vmem>>, %arg7: memref<1x128xf32, #tpu.memory_space<vmem>>, %arg8: memref<8x128xf32, #tpu.memory_space<vmem>>) attributes {dimension_semantics = [#tpu.dimension_semantics<parallel>], iteration_bounds = array<i64: 1>, scalar_prefetch = 0 : i64, scratch_operands = 0 : i64, tpu.core_type = #tpu.core_type<tc>, window_params = [{transform_indices = @transform_0, window_bounds = array<i64: 8, 128>}, {pipeline_mode = #tpu.pipeline_mode<synchronous>, transform_indices = @transform_1, window_bounds = array<i64: 128, 128>}, {pipeline_mode = #tpu.pipeline_mode<synchronous>, transform_indices = @transform_2, window_bounds = array<i64: 1, 128>}, {pipeline_mode = #tpu.pipeline_mode<synchronous>, transform_indices = @transform_3, window_bounds = array<i64: 128, 128>}, {pipeline_mode = #tpu.pipeline_mode<synchronous>, transform_indices = @transform_4, window_bounds = array<i64: 1, 128>}, {pipeline_mode = #tpu.pipeline_mode<synchronous>, transform_indices = @transform_5, window_bounds = array<i64: 128, 128>}, {pipeline_mode = #tpu.pipeline_mode<synchronous>, transform_indices = @transform_6, window_bounds = array<i64: 1, 128>}, {transform_indices = @transform_7, window_bounds = array<i64: 8, 128>}]} {
    %c0 = arith.constant 0 : index
    %c0_0 = arith.constant 0 : index
    %0 = vector.load %arg1[%c0, %c0_0] : memref<8x128xf32, #tpu.memory_space<vmem>>, vector<8x128xf32>
    %c0_1 = arith.constant 0 : index
    %c0_2 = arith.constant 0 : index
    %1 = vector.load %arg2[%c0_1, %c0_2] : memref<128x128xf32, #tpu.memory_space<vmem>>, vector<128x128xf32>
    %cst = arith.constant dense<0.000000e+00> : vector<8x128xf32>
    %2 = tpu.matmul %0, %1, %cst {dimension_numbers = #tpu.dot_dimension_numbers<[1], [0], [0], [1], [0, 0, 1, 1], [], []>, precision = #tpu.contract_precision<fp32>} : vector<8x128xf32>, vector<128x128xf32>, vector<8x128xf32> -> vector<8x128xf32>
    %c0_3 = arith.constant 0 : index
    %c0_4 = arith.constant 0 : index
    %3 = vector.load %arg3[%c0_3, %c0_4] : memref<1x128xf32, #tpu.memory_space<vmem>>, vector<1x128xf32>
    %4 = vector.broadcast %3 : vector<1x128xf32> to vector<8x128xf32>
    %5 = arith.addf %2, %4 : vector<8x128xf32>
    %cst_5 = arith.constant 0.000000e+00 : f32
    %6 = vector.broadcast %cst_5 : f32 to vector<8x128xf32>
    %7 = arith.maximumf %5, %6 : vector<8x128xf32>
    %c0_6 = arith.constant 0 : index
    %c0_7 = arith.constant 0 : index
    %8 = vector.load %arg4[%c0_6, %c0_7] : memref<128x128xf32, #tpu.memory_space<vmem>>, vector<128x128xf32>
    %cst_8 = arith.constant dense<0.000000e+00> : vector<8x128xf32>
    %9 = tpu.matmul %7, %8, %cst_8 {dimension_numbers = #tpu.dot_dimension_numbers<[1], [0], [0], [1], [0, 0, 1, 1], [], []>, precision = #tpu.contract_precision<fp32>} : vector<8x128xf32>, vector<128x128xf32>, vector<8x128xf32> -> vector<8x128xf32>
    %c0_9 = arith.constant 0 : index
    %c0_10 = arith.constant 0 : index
    %10 = vector.load %arg5[%c0_9, %c0_10] : memref<1x128xf32, #tpu.memory_space<vmem>>, vector<1x128xf32>
    %11 = vector.broadcast %10 : vector<1x128xf32> to vector<8x128xf32>
    %12 = arith.addf %9, %11 : vector<8x128xf32>
    %cst_11 = arith.constant 0.000000e+00 : f32
    %13 = vector.broadcast %cst_11 : f32 to vector<8x128xf32>
    %14 = arith.maximumf %12, %13 : vector<8x128xf32>
    %c0_12 = arith.constant 0 : index
    %c0_13 = arith.constant 0 : index
    %15 = vector.load %arg6[%c0_12, %c0_13] : memref<128x128xf32, #tpu.memory_space<vmem>>, vector<128x128xf32>
    %cst_14 = arith.constant dense<0.000000e+00> : vector<8x128xf32>
    %16 = tpu.matmul %14, %15, %cst_14 {dimension_numbers = #tpu.dot_dimension_numbers<[1], [0], [0], [1], [0, 0, 1, 1], [], []>, precision = #tpu.contract_precision<fp32>} : vector<8x128xf32>, vector<128x128xf32>, vector<8x128xf32> -> vector<8x128xf32>
    %c0_15 = arith.constant 0 : index
    %c0_16 = arith.constant 0 : index
    %17 = vector.load %arg7[%c0_15, %c0_16] : memref<1x128xf32, #tpu.memory_space<vmem>>, vector<1x128xf32>
    %18 = vector.broadcast %17 : vector<1x128xf32> to vector<8x128xf32>
    %19 = arith.addf %16, %18 : vector<8x128xf32>
    %c0_17 = arith.constant 0 : index
    %c0_18 = arith.constant 0 : index
    %20 = vector.load %arg8[%c0_17, %c0_18] : memref<8x128xf32, #tpu.memory_space<vmem>>, vector<8x128xf32>
    tpu.vector_store %arg8[%c0_17, %c0_18], %19 {strides = array<i32>} : memref<8x128xf32, #tpu.memory_space<vmem>>, vector<8x128xf32>,
    return
  }
  func.func @transform_0(%arg0: i32) -> (i32, i32) {
    %c0_i32 = arith.constant 0 : i32
    %c0_i32_0 = arith.constant 0 : i32
    return %arg0, %c0_i32 : i32, i32
  }
  func.func @transform_1(%arg0: i32) -> (i32, i32) {
    %c0_i32 = arith.constant 0 : i32
    %c0_i32_0 = arith.constant 0 : i32
    %c0_i32_1 = arith.constant 0 : i32
    return %c0_i32, %c0_i32_0 : i32, i32
  }
  func.func @transform_2(%arg0: i32) -> (i32, i32) {
    %c0_i32 = arith.constant 0 : i32
    %c0_i32_0 = arith.constant 0 : i32
    %c0_i32_1 = arith.constant 0 : i32
    return %c0_i32, %c0_i32_0 : i32, i32
  }
  func.func @transform_3(%arg0: i32) -> (i32, i32) {
    %c0_i32 = arith.constant 0 : i32
    %c0_i32_0 = arith.constant 0 : i32
    %c0_i32_1 = arith.constant 0 : i32
    return %c0_i32, %c0_i32_0 : i32, i32
  }
  func.func @transform_4(%arg0: i32) -> (i32, i32) {
    %c0_i32 = arith.constant 0 : i32
    %c0_i32_0 = arith.constant 0 : i32
    %c0_i32_1 = arith.constant 0 : i32
    return %c0_i32, %c0_i32_0 : i32, i32
  }
  func.func @transform_5(%arg0: i32) -> (i32, i32) {
    %c0_i32 = arith.constant 0 : i32
    %c0_i32_0 = arith.constant 0 : i32
    %c0_i32_1 = arith.constant 0 : i32
    return %c0_i32, %c0_i32_0 : i32, i32
  }
  func.func @transform_6(%arg0: i32) -> (i32, i32) {
    %c0_i32 = arith.constant 0 : i32
    %c0_i32_0 = arith.constant 0 : i32
    %c0_i32_1 = arith.constant 0 : i32
    return %c0_i32, %c0_i32_0 : i32, i32
  }
  func.func @transform_7(%arg0: i32) -> (i32, i32) {
    %c0_i32 = arith.constant 0 : i32
    %c0_i32_0 = arith.constant 0 : i32
    return %arg0, %c0_i32 : i32, i32
  }
}

</mosaic_0001>

<llo_original>
// kernel: neural_net_forward.1
$region0: #{neural_net_forward.1}
  #allocation0 [shape = 'u32[]', space=smem, size = 0x4, offset = 0x4, fixed_abs, tag = 'smem constant byte address 0x4 - core index']
  #allocation1 [shape = 'u32[144,128]{1,0:T(1,128)}', space=vmem, size = 0x12000, scoped, tag = 'internal scratch']
  %s0 = inlined_call_operand.vmem [shape: f32[8,128], index: 0, kind: input, shape index: {}]
  %s1 = inlined_call_operand.hbm [shape: f32[128,128], index: 1, kind: input, shape index: {}]
  %s2 = inlined_call_operand.vmem [shape: f32[1,128], index: 2, kind: input, shape index: {}]
  %s3 = inlined_call_operand.hbm [shape: f32[128,128], index: 3, kind: input, shape index: {}]
  %s4 = inlined_call_operand.vmem [shape: f32[1,128], index: 4, kind: input, shape index: {}]
  %s5 = inlined_call_operand.hbm [shape: f32[128,128], index: 5, kind: input, shape index: {}]
  %s6 = inlined_call_operand.vmem [shape: f32[1,128], index: 6, kind: input, shape index: {}]
  %s7 = inlined_call_operand.vmem [shape: f32[8,128], index: 7, kind: output, shape index: {}]
  %s8 = sld [smem:[#allocation0]]
  $region50: #{neural_net_forward.1} parent=0
    _
  %s10 = ssub.s32 1, %s8
  %s11 = scalar_select 0, %s10, %s8
  $region1: #{neural_net_forward.1} parent=0
    #allocation2 [shape = 'u8[65536]{0}', space=vmem, size = 0x10000, scoped, tag = 'input window, operand 1, single buffered']
    #allocation3 [shape = 's32[1]{0}', space=sflag, size = 0x4, scoped, tag = 'scoped memory for neural_net_forward.1']
    #allocation4 [shape = 'u8[65536]{0}', space=vmem, size = 0x10000, scoped, tag = 'input window, operand 3, single buffered']
    #allocation5 [shape = 's32[1]{0}', space=sflag, size = 0x4, scoped, tag = 'scoped memory for neural_net_forward.1']
    #allocation6 [shape = 'u8[65536]{0}', space=vmem, size = 0x10000, scoped, tag = 'input window, operand 5, single buffered']
    %12 = vsyncpa [#allocation3], 0
    %13 = vsyncpa [#allocation5], 0
    // Predicated region
    $region2: #{neural_net_forward.1} parent=1 // pred_check
      _
    $region3: #{neural_net_forward.1} parent=1 // pred_check_branch
      %15 = sbr.rel (0) target = $region5
    $region4: #{neural_net_forward.1} parent=1 // pred_region
      _
    $region5: #{neural_net_forward.1} parent=1 // pred_fallthru
      _
    // Predicated region
    $region6: #{neural_net_forward.1} parent=1 // pred_check
      _
    $region7: #{neural_net_forward.1} parent=1 // pred_check_branch
      %17 = sbr.rel (0) target = $region9
    $region8: #{neural_net_forward.1} parent=1 // pred_region
      %s19 = ssub.s32 2048, 2048
      %20 = vsyncadd [#allocation3], %s19
      %s21 = sshll.u32 [#allocation2], 4
      %s22 = int_to_ptr.vmem [resolvable:$true] %s21
      %27 = dma.hbm_to_vmem [thread:$0]  %s1, 2048, %s22, [#allocation3], 128, 128, 8
    $region9: #{neural_net_forward.1} parent=1 // pred_fallthru
      _
    // Predicated region
    $region10: #{neural_net_forward.1} parent=1 // pred_check
      _
    $region11: #{neural_net_forward.1} parent=1 // pred_check_branch
      %29 = sbr.rel (0) target = $region13
    $region12: #{neural_net_forward.1} parent=1 // pred_region
      _
    $region13: #{neural_net_forward.1} parent=1 // pred_fallthru
      _
    // Predicated region
    $region14: #{neural_net_forward.1} parent=1 // pred_check
      _
    $region15: #{neural_net_forward.1} parent=1 // pred_check_branch
      %31 = sbr.rel (0) target = $region17
    $region16: #{neural_net_forward.1} parent=1 // pred_region
      %s33 = ssub.s32 2048, 2048
      %34 = vsyncadd [#allocation5], %s33
      %s35 = sshll.u32 [#allocation4], 4
      %s36 = int_to_ptr.vmem [resolvable:$true] %s35
      %41 = dma.hbm_to_vmem [thread:$0]  %s3, 2048, %s36, [#allocation5], 128, 128, 8
    $region17: #{neural_net_forward.1} parent=1 // pred_fallthru
      _
    // Predicated region
    $region18: #{neural_net_forward.1} parent=1 // pred_check
      _
    $region19: #{neural_net_forward.1} parent=1 // pred_check_branch
      %43 = sbr.rel (0) target = $region21
    $region20: #{neural_net_forward.1} parent=1 // pred_region
      _
    $region21: #{neural_net_forward.1} parent=1 // pred_fallthru
      _
    // Predicated region
    $region22: #{neural_net_forward.1} parent=1 // pred_check
      _
    $region23: #{neural_net_forward.1} parent=1 // pred_check_branch
      %45 = sbr.rel (0) target = $region25
    $region24: #{neural_net_forward.1} parent=1 // pred_region
      %s47 = ssub.s32 2048, 2048
      %48 = vsyncadd [#allocation5], %s47
      %s49 = sshll.u32 [#allocation6], 4
      %s50 = int_to_ptr.vmem [resolvable:$true] %s49
      %55 = dma.hbm_to_vmem [thread:$0]  %s5, 2048, %s50, [#allocation5], 128, 128, 8
    $region25: #{neural_net_forward.1} parent=1 // pred_fallthru
      _
    // Predicated region
    $region26: #{neural_net_forward.1} parent=1 // pred_check
      _
    $region27: #{neural_net_forward.1} parent=1 // pred_check_branch
      %57 = sbr.rel (0) target = $region29
    $region28: #{neural_net_forward.1} parent=1 // pred_region
      _
    $region29: #{neural_net_forward.1} parent=1 // pred_fallthru
      _
    // Predicated region
    $region30: #{neural_net_forward.1} parent=1 // pred_check
      _
    $region31: #{neural_net_forward.1} parent=1 // pred_check_branch
      %59 = sbr.rel (0) target = $region33
    $region32: #{neural_net_forward.1} parent=1 // pred_region
      %60 = dma.done [#allocation3], 2048
    $region33: #{neural_net_forward.1} parent=1 // pred_fallthru
      _
    // Predicated region
    $region34: #{neural_net_forward.1} parent=1 // pred_check
      _
    $region35: #{neural_net_forward.1} parent=1 // pred_check_branch
      %62 = sbr.rel (0) target = $region37
    $region36: #{neural_net_forward.1} parent=1 // pred_region
      %63 = dma.done [#allocation5], 2048
    $region37: #{neural_net_forward.1} parent=1 // pred_fallthru
      _
    // Predicated region
    $region38: #{neural_net_forward.1} parent=1 // pred_check
      _
    $region39: #{neural_net_forward.1} parent=1 // pred_check_branch
      %65 = sbr.rel (0) target = $region41
    $region40: #{neural_net_forward.1} parent=1 // pred_region
      %66 = dma.done [#allocation5], 2048
    $region41: #{neural_net_forward.1} parent=1 // pred_fallthru
      _
    %v67 = vld [vmem:[%s0] sm:$0xff]
    %v68 = vld [vmem:[#allocation2] sm:$0xff]
    %v69 = vld [vmem:[#allocation2 + $0x8] sm:$0xff]
    %v70 = vld [vmem:[#allocation2 + $0x10] sm:$0xff]
    %v71 = vld [vmem:[#allocation2 + $0x18] sm:$0xff]
    %v72 = vld [vmem:[#allocation2 + $0x20] sm:$0xff]
    %v73 = vld [vmem:[#allocation2 + $0x28] sm:$0xff]
    %v74 = vld [vmem:[#allocation2 + $0x30] sm:$0xff]
    %v75 = vld [vmem:[#allocation2 + $0x38] sm:$0xff]
    %v76 = vld [vmem:[#allocation2 + $0x40] sm:$0xff]
    %v77 = vld [vmem:[#allocation2 + $0x48] sm:$0xff]
    %v78 = vld [vmem:[#allocation2 + $0x50] sm:$0xff]
    %v79 = vld [vmem:[#allocation2 + $0x58] sm:$0xff]
    %v80 = vld [vmem:[#allocation2 + $0x60] sm:$0xff]
    %v81 = vld [vmem:[#allocation2 + $0x68] sm:$0xff]
    %v82 = vld [vmem:[#allocation2 + $0x70] sm:$0xff]
    %v83 = vld [vmem:[#allocation2 + $0x78] sm:$0xff]
    %v84 = vld [vmem:[%s2] sm:$0x1]
    %v86 = vlaneseq
    %v87 = vshrl.u32 %v86, 7
    %v88 = vsub.s32 0, %v87
    %v89 = vrot.slane %v84, %v88
    %91 = vmatprep.subr.mxu0 0.0
    %v92 = vand.u32 %v68, 4294901760
    %93 = vmatpush1.msra.mxu0 %v92
    %94 = vmatprep.subr.mxu0 0.0
    %v95 = vand.u32 %v69, 4294901760
    %96 = vmatpush1.msra.mxu0 %v95
    %97 = vmatprep.subr.mxu0 0.0
    %v98 = vand.u32 %v70, 4294901760
    %99 = vmatpush1.msra.mxu0 %v98
    %100 = vmatprep.subr.mxu0 0.0
    %v101 = vand.u32 %v71, 4294901760
    %102 = vmatpush1.msra.mxu0 %v101
    %103 = vmatprep.subr.mxu0 0.0
    %v104 = vand.u32 %v72, 4294901760
    %105 = vmatpush1.msra.mxu0 %v104
    %106 = vmatprep.subr.mxu0 0.0
    %v107 = vand.u32 %v73, 4294901760
    %108 = vmatpush1.msra.mxu0 %v107
    %109 = vmatprep.subr.mxu0 0.0
    %v110 = vand.u32 %v74, 4294901760
    %111 = vmatpush1.msra.mxu0 %v110
    %112 = vmatprep.subr.mxu0 0.0
    %v113 = vand.u32 %v75, 4294901760
    %114 = vmatpush1.msra.mxu0 %v113
    %115 = vmatprep.subr.mxu0 0.0
    %v116 = vand.u32 %v76, 4294901760
    %117 = vmatpush1.msra.mxu0 %v116
    %118 = vmatprep.subr.mxu0 0.0
    %v119 = vand.u32 %v77, 4294901760
    %120 = vmatpush1.msra.mxu0 %v119
    %121 = vmatprep.subr.mxu0 0.0
    %v122 = vand.u32 %v78, 4294901760
    %123 = vmatpush1.msra.mxu0 %v122
    %124 = vmatprep.subr.mxu0 0.0
    %v125 = vand.u32 %v79, 4294901760
    %126 = vmatpush1.msra.mxu0 %v125
    %127 = vmatprep.subr.mxu0 0.0
    %v128 = vand.u32 %v80, 4294901760
    %129 = vmatpush1.msra.mxu0 %v128
    %130 = vmatprep.subr.mxu0 0.0
    %v131 = vand.u32 %v81, 4294901760
    %132 = vmatpush1.msra.mxu0 %v131
    %133 = vmatprep.subr.mxu0 0.0
    %v134 = vand.u32 %v82, 4294901760
    %135 = vmatpush1.msra.mxu0 %v134
    %136 = vmatprep.subr.mxu0 0.0
    %v137 = vand.u32 %v83, 4294901760
    %138 = vmatpush1.msra.mxu0 %v137
    %139 = vmatprep.subr.mxu0 0.0
    %140 = vmatpush1.msra.mxu0 0.0
    %141 = vmatprep.subr.mxu0 0.0
    %142 = vmatpush1.msra.mxu0 0.0
    %143 = vmatprep.subr.mxu0 0.0
    %144 = vmatpush1.msra.mxu0 0.0
    %145 = vmatprep.subr.mxu0 0.0
    %146 = vmatpush1.msra.mxu0 0.0
    %147 = vmatprep.subr.mxu0 0.0
    %148 = vmatpush1.msra.mxu0 0.0
    %149 = vmatprep.subr.mxu0 0.0
    %150 = vmatpush1.msra.mxu0 0.0
    %151 = vmatprep.subr.mxu0 0.0
    %152 = vmatpush1.msra.mxu0 0.0
    %153 = vmatprep.subr.mxu0 0.0
    %154 = vmatpush1.msra.mxu0 0.0
    %155 = vmatprep.subr.mxu0 0.0
    %156 = vmatpush1.msra.mxu0 0.0
    %157 = vmatprep.subr.mxu0 0.0
    %158 = vmatpush1.msra.mxu0 0.0
    %159 = vmatprep.subr.mxu0 0.0
    %160 = vmatpush1.msra.mxu0 0.0
    %161 = vmatprep.subr.mxu0 0.0
    %162 = vmatpush1.msra.mxu0 0.0
    %163 = vmatprep.subr.mxu0 0.0
    %164 = vmatpush1.msra.mxu0 0.0
    %165 = vmatprep.subr.mxu0 0.0
    %166 = vmatpush1.msra.mxu0 0.0
    %167 = vmatprep.subr.mxu0 0.0
    %168 = vmatpush1.msra.mxu0 0.0
    %169 = vmatprep.subr.mxu0 0.0
    %170 = vmatpush1.msra.mxu0 0.0
    %171 = vmatprep.mubr.f32.mxu0 0.0
    %v172 = vand.u32 %v67, 4294901760
    %v173 = vsub.f32 %v67, %v172
    %v174 = vand.u32 %v173, 4294901760
    %v175 = vsub.f32 %v173, %v174
    %v176 = vand.u32 %v175, 4294901760
    %177 = vmatmul.mubr.f32.gmra.mrb[0].mxu0 %v176
    %v178 = vpop.f32.mrb[0].mxu0
    %v179 = vadd.f32 %v89, %v178
    %v180 = vpop.f32.mrb[0].mxu0
    %181 = vdwg.mxu0
    %182 = vmatprep.subr.mxu0 0.0
    %v183 = vand.u32 %v68, 4294901760
    %v184 = vsub.f32 %v68, %v183
    %v185 = vand.u32 %v184, 4294901760
    %v186 = vsub.f32 %v184, %v185
    %v187 = vand.u32 %v186, 4294901760
    %188 = vmatpush1.msra.mxu0 %v187
    %189 = vmatprep.subr.mxu0 0.0
    %v190 = vand.u32 %v69, 4294901760
    %v191 = vsub.f32 %v69, %v190
    %v192 = vand.u32 %v191, 4294901760
    %v193 = vsub.f32 %v191, %v192
    %v194 = vand.u32 %v193, 4294901760
    %195 = vmatpush1.msra.mxu0 %v194
    %196 = vmatprep.subr.mxu0 0.0
    %v197 = vand.u32 %v70, 4294901760
    %v198 = vsub.f32 %v70, %v197
    %v199 = vand.u32 %v198, 4294901760
    %v200 = vsub.f32 %v198, %v199
    %v201 = vand.u32 %v200, 4294901760
    %202 = vmatpush1.msra.mxu0 %v201
    %203 = vmatprep.subr.mxu0 0.0
    %v204 = vand.u32 %v71, 4294901760
    %v205 = vsub.f32 %v71, %v204
    %v206 = vand.u32 %v205, 4294901760
    %v207 = vsub.f32 %v205, %v206
    %v208 = vand.u32 %v207, 4294901760
    %209 = vmatpush1.msra.mxu0 %v208
    %210 = vmatprep.subr.mxu0 0.0
    %v211 = vand.u32 %v72, 4294901760
    %v212 = vsub.f32 %v72, %v211
    %v213 = vand.u32 %v212, 4294901760
    %v214 = vsub.f32 %v212, %v213
    %v215 = vand.u32 %v214, 4294901760
    %216 = vmatpush1.msra.mxu0 %v215
    %217 = vmatprep.subr.mxu0 0.0
    %v218 = vand.u32 %v73, 4294901760
    %v219 = vsub.f32 %v73, %v218
    %v220 = vand.u32 %v219, 4294901760
    %v221 = vsub.f32 %v219, %v220
    %v222 = vand.u32 %v221, 4294901760
    %223 = vmatpush1.msra.mxu0 %v222
    %224 = vmatprep.subr.mxu0 0.0
    %v225 = vand.u32 %v74, 4294901760
    %v226 = vsub.f32 %v74, %v225
    %v227 = vand.u32 %v226, 4294901760
    %v228 = vsub.f32 %v226, %v227
    %v229 = vand.u32 %v228, 4294901760
    %230 = vmatpush1.msra.mxu0 %v229
    %231 = vmatprep.subr.mxu0 0.0
    %v232 = vand.u32 %v75, 4294901760
    %v233 = vsub.f32 %v75, %v232
    %v234 = vand.u32 %v233, 4294901760
    %v235 = vsub.f32 %v233, %v234
    %v236 = vand.u32 %v235, 4294901760
    %237 = vmatpush1.msra.mxu0 %v236
    %238 = vmatprep.subr.mxu0 0.0
    %v239 = vand.u32 %v76, 4294901760
    %v240 = vsub.f32 %v76, %v239
    %v241 = vand.u32 %v240, 4294901760
    %v242 = vsub.f32 %v240, %v241
    %v243 = vand.u32 %v242, 4294901760
    %244 = vmatpush1.msra.mxu0 %v243
    %245 = vmatprep.subr.mxu0 0.0
    %v246 = vand.u32 %v77, 4294901760
    %v247 = vsub.f32 %v77, %v246
    %v248 = vand.u32 %v247, 4294901760
    %v249 = vsub.f32 %v247, %v248
    %v250 = vand.u32 %v249, 4294901760
    %251 = vmatpush1.msra.mxu0 %v250
    %252 = vmatprep.subr.mxu0 0.0
    %v253 = vand.u32 %v78, 4294901760
    %v254 = vsub.f32 %v78, %v253
    %v255 = vand.u32 %v254, 4294901760
    %v256 = vsub.f32 %v254, %v255
    %v257 = vand.u32 %v256, 4294901760
    %258 = vmatpush1.msra.mxu0 %v257
    %259 = vmatprep.subr.mxu0 0.0
    %v260 = vand.u32 %v79, 4294901760
    %v261 = vsub.f32 %v79, %v260
    %v262 = vand.u32 %v261, 4294901760
    %v263 = vsub.f32 %v261, %v262
    %v264 = vand.u32 %v263, 4294901760
    %265 = vmatpush1.msra.mxu0 %v264
    %266 = vmatprep.subr.mxu0 0.0
    %v267 = vand.u32 %v80, 4294901760
    %v268 = vsub.f32 %v80, %v267
    %v269 = vand.u32 %v268, 4294901760
    %v270 = vsub.f32 %v268, %v269
    %v271 = vand.u32 %v270, 4294901760
    %272 = vmatpush1.msra.mxu0 %v271
    %273 = vmatprep.subr.mxu0 0.0
    %v274 = vand.u32 %v81, 4294901760
    %v275 = vsub.f32 %v81, %v274
    %v276 = vand.u32 %v275, 4294901760
    %v277 = vsub.f32 %v275, %v276
    %v278 = vand.u32 %v277, 4294901760
    %279 = vmatpush1.msra.mxu0 %v278
    %280 = vmatprep.subr.mxu0 0.0
    %v281 = vand.u32 %v82, 4294901760
    %v282 = vsub.f32 %v82, %v281
    %v283 = vand.u32 %v282, 4294901760
    %v284 = vsub.f32 %v282, %v283
    %v285 = vand.u32 %v284, 4294901760
    %286 = vmatpush1.msra.mxu0 %v285
    %287 = vmatprep.subr.mxu0 0.0
    %v288 = vand.u32 %v83, 4294901760
    %v289 = vsub.f32 %v83, %v288
    %v290 = vand.u32 %v289, 4294901760
    %v291 = vsub.f32 %v289, %v290
    %v292 = vand.u32 %v291, 4294901760
    %293 = vmatpush1.msra.mxu0 %v292
    %294 = vmatprep.subr.mxu0 0.0
    %295 = vmatpush1.msra.mxu0 0.0
    %296 = vmatprep.subr.mxu0 0.0
    %297 = vmatpush1.msra.mxu0 0.0
    %298 = vmatprep.subr.mxu0 0.0
    %299 = vmatpush1.msra.mxu0 0.0
    %300 = vmatprep.subr.mxu0 0.0
    %301 = vmatpush1.msra.mxu0 0.0
    %302 = vmatprep.subr.mxu0 0.0
    %303 = vmatpush1.msra.mxu0 0.0
    %304 = vmatprep.subr.mxu0 0.0
    %305 = vmatpush1.msra.mxu0 0.0
    %306 = vmatprep.subr.mxu0 0.0
    %307 = vmatpush1.msra.mxu0 0.0
    %308 = vmatprep.subr.mxu0 0.0
    %309 = vmatpush1.msra.mxu0 0.0
    %310 = vmatprep.subr.mxu0 0.0
    %311 = vmatpush1.msra.mxu0 0.0
    %312 = vmatprep.subr.mxu0 0.0
    %313 = vmatpush1.msra.mxu0 0.0
    %314 = vmatprep.subr.mxu0 0.0
    %315 = vmatpush1.msra.mxu0 0.0
    %316 = vmatprep.subr.mxu0 0.0
    %317 = vmatpush1.msra.mxu0 0.0
    %318 = vmatprep.subr.mxu0 0.0
    %319 = vmatpush1.msra.mxu0 0.0
    %320 = vmatprep.subr.mxu0 0.0
    %321 = vmatpush1.msra.mxu0 0.0
    %322 = vmatprep.subr.mxu0 0.0
    %323 = vmatpush1.msra.mxu0 0.0
    %324 = vmatprep.subr.mxu0 0.0
    %325 = vmatpush1.msra.mxu0 0.0
    %326 = vmatprep.mubr.f32.mxu0 0.0
    %v327 = vand.u32 %v67, 4294901760
    %328 = vmatmul.mubr.f32.gmra.mrb[0].mxu0 %v327
    %v329 = vpop.f32.mrb[0].mxu0
    %v330 = vadd.f32 %v179, %v329
    %v331 = vpop.f32.mrb[0].mxu0
    %332 = vdwg.mxu0
    %333 = vmatprep.subr.mxu0 0.0
    %v334 = vand.u32 %v68, 4294901760
    %v335 = vsub.f32 %v68, %v334
    %336 = vmatpush1.msra.mxu0 %v335
    %337 = vmatprep.subr.mxu0 0.0
    %v338 = vand.u32 %v69, 4294901760
    %v339 = vsub.f32 %v69, %v338
    %340 = vmatpush1.msra.mxu0 %v339
    %341 = vmatprep.subr.mxu0 0.0
    %v342 = vand.u32 %v70, 4294901760
    %v343 = vsub.f32 %v70, %v342
    %344 = vmatpush1.msra.mxu0 %v343
    %345 = vmatprep.subr.mxu0 0.0
    %v346 = vand.u32 %v71, 4294901760
    %v347 = vsub.f32 %v71, %v346
    %348 = vmatpush1.msra.mxu0 %v347
    %349 = vmatprep.subr.mxu0 0.0
    %v350 = vand.u32 %v72, 4294901760
    %v351 = vsub.f32 %v72, %v350
    %352 = vmatpush1.msra.mxu0 %v351
    %353 = vmatprep.subr.mxu0 0.0
    %v354 = vand.u32 %v73, 4294901760
    %v355 = vsub.f32 %v73, %v354
    %356 = vmatpush1.msra.mxu0 %v355
    %357 = vmatprep.subr.mxu0 0.0
    %v358 = vand.u32 %v74, 4294901760
    %v359 = vsub.f32 %v74, %v358
    %360 = vmatpush1.msra.mxu0 %v359
    %361 = vmatprep.subr.mxu0 0.0
    %v362 = vand.u32 %v75, 4294901760
    %v363 = vsub.f32 %v75, %v362
    %364 = vmatpush1.msra.mxu0 %v363
    %365 = vmatprep.subr.mxu0 0.0
    %v366 = vand.u32 %v76, 4294901760
    %v367 = vsub.f32 %v76, %v366
    %368 = vmatpush1.msra.mxu0 %v367
    %369 = vmatprep.subr.mxu0 0.0
    %v370 = vand.u32 %v77, 4294901760
    %v371 = vsub.f32 %v77, %v370
    %372 = vmatpush1.msra.mxu0 %v371
    %373 = vmatprep.subr.mxu0 0.0
    %v374 = vand.u32 %v78, 4294901760
    %v375 = vsub.f32 %v78, %v374
    %376 = vmatpush1.msra.mxu0 %v375
    %377 = vmatprep.subr.mxu0 0.0
    %v378 = vand.u32 %v79, 4294901760
    %v379 = vsub.f32 %v79, %v378
    %380 = vmatpush1.msra.mxu0 %v379
    %381 = vmatprep.subr.mxu0 0.0
    %v382 = vand.u32 %v80, 4294901760
    %v383 = vsub.f32 %v80, %v382
    %384 = vmatpush1.msra.mxu0 %v383
    %385 = vmatprep.subr.mxu0 0.0
    %v386 = vand.u32 %v81, 4294901760
    %v387 = vsub.f32 %v81, %v386
    %388 = vmatpush1.msra.mxu0 %v387
    %389 = vmatprep.subr.mxu0 0.0
    %v390 = vand.u32 %v82, 4294901760
    %v391 = vsub.f32 %v82, %v390
    %392 = vmatpush1.msra.mxu0 %v391
    %393 = vmatprep.subr.mxu0 0.0
    %v394 = vand.u32 %v83, 4294901760
    %v395 = vsub.f32 %v83, %v394
    %396 = vmatpush1.msra.mxu0 %v395
    %397 = vmatprep.subr.mxu0 0.0
    %398 = vmatpush1.msra.mxu0 0.0
    %399 = vmatprep.subr.mxu0 0.0
    %400 = vmatpush1.msra.mxu0 0.0
    %401 = vmatprep.subr.mxu0 0.0
    %402 = vmatpush1.msra.mxu0 0.0
    %403 = vmatprep.subr.mxu0 0.0
    %404 = vmatpush1.msra.mxu0 0.0
    %405 = vmatprep.subr.mxu0 0.0
    %406 = vmatpush1.msra.mxu0 0.0
    %407 = vmatprep.subr.mxu0 0.0
    %408 = vmatpush1.msra.mxu0 0.0
    %409 = vmatprep.subr.mxu0 0.0
    %410 = vmatpush1.msra.mxu0 0.0
    %411 = vmatprep.subr.mxu0 0.0
    %412 = vmatpush1.msra.mxu0 0.0
    %413 = vmatprep.subr.mxu0 0.0
    %414 = vmatpush1.msra.mxu0 0.0
    %415 = vmatprep.subr.mxu0 0.0
    %416 = vmatpush1.msra.mxu0 0.0
    %417 = vmatprep.subr.mxu0 0.0
    %418 = vmatpush1.msra.mxu0 0.0
    %419 = vmatprep.subr.mxu0 0.0
    %420 = vmatpush1.msra.mxu0 0.0
    %421 = vmatprep.subr.mxu0 0.0
    %422 = vmatpush1.msra.mxu0 0.0
    %423 = vmatprep.subr.mxu0 0.0
    %424 = vmatpush1.msra.mxu0 0.0
    %425 = vmatprep.subr.mxu0 0.0
    %426 = vmatpush1.msra.mxu0 0.0
    %427 = vmatprep.subr.mxu0 0.0
    %428 = vmatpush1.msra.mxu0 0.0
    %429 = vmatprep.mubr.f32.mxu0 0.0
    %v430 = vand.u32 %v67, 4294901760
    %v431 = vsub.f32 %v67, %v430
    %432 = vmatmul.mubr.f32.gmra.mrb[0].mxu0 %v431
    %v433 = vpop.f32.mrb[0].mxu0
    %v434 = vadd.f32 %v330, %v433
    %v435 = vpop.f32.mrb[0].mxu0
    %436 = vdwg.mxu0
    %437 = vmatprep.subr.mxu0 0.0
    %v438 = vand.u32 %v68, 4294901760
    %439 = vmatpush1.msra.mxu0 %v438
    %440 = vmatprep.subr.mxu0 0.0
    %v441 = vand.u32 %v69, 4294901760
    %442 = vmatpush1.msra.mxu0 %v441
    %443 = vmatprep.subr.mxu0 0.0
    %v444 = vand.u32 %v70, 4294901760
    %445 = vmatpush1.msra.mxu0 %v444
    %446 = vmatprep.subr.mxu0 0.0
    %v447 = vand.u32 %v71, 4294901760
    %448 = vmatpush1.msra.mxu0 %v447
    %449 = vmatprep.subr.mxu0 0.0
    %v450 = vand.u32 %v72, 4294901760
    %451 = vmatpush1.msra.mxu0 %v450
    %452 = vmatprep.subr.mxu0 0.0
    %v453 = vand.u32 %v73, 4294901760
    %454 = vmatpush1.msra.mxu0 %v453
    %455 = vmatprep.subr.mxu0 0.0
    %v456 = vand.u32 %v74, 4294901760
    %457 = vmatpush1.msra.mxu0 %v456
    %458 = vmatprep.subr.mxu0 0.0
    %v459 = vand.u32 %v75, 4294901760
    %460 = vmatpush1.msra.mxu0 %v459
    %461 = vmatprep.subr.mxu0 0.0
    %v462 = vand.u32 %v76, 4294901760
    %463 = vmatpush1.msra.mxu0 %v462
    %464 = vmatprep.subr.mxu0 0.0
    %v465 = vand.u32 %v77, 4294901760
    %466 = vmatpush1.msra.mxu0 %v465
    %467 = vmatprep.subr.mxu0 0.0
    %v468 = vand.u32 %v78, 4294901760
    %469 = vmatpush1.msra.mxu0 %v468
    %470 = vmatprep.subr.mxu0 0.0
    %v471 = vand.u32 %v79, 4294901760
    %472 = vmatpush1.msra.mxu0 %v471
    %473 = vmatprep.subr.mxu0 0.0
    %v474 = vand.u32 %v80, 4294901760
    %475 = vmatpush1.msra.mxu0 %v474
    %476 = vmatprep.subr.mxu0 0.0
    %v477 = vand.u32 %v81, 4294901760
    %478 = vmatpush1.msra.mxu0 %v477
    %479 = vmatprep.subr.mxu0 0.0
    %v480 = vand.u32 %v82, 4294901760
    %481 = vmatpush1.msra.mxu0 %v480
    %482 = vmatprep.subr.mxu0 0.0
    %v483 = vand.u32 %v83, 4294901760
    %484 = vmatpush1.msra.mxu0 %v483
    %485 = vmatprep.subr.mxu0 0.0
    %486 = vmatpush1.msra.mxu0 0.0
    %487 = vmatprep.subr.mxu0 0.0
    %488 = vmatpush1.msra.mxu0 0.0
    %489 = vmatprep.subr.mxu0 0.0
    %490 = vmatpush1.msra.mxu0 0.0
    %491 = vmatprep.subr.mxu0 0.0
    %492 = vmatpush1.msra.mxu0 0.0
    %493 = vmatprep.subr.mxu0 0.0
    %494 = vmatpush1.msra.mxu0 0.0
    %495 = vmatprep.subr.mxu0 0.0
    %496 = vmatpush1.msra.mxu0 0.0
    %497 = vmatprep.subr.mxu0 0.0
    %498 = vmatpush1.msra.mxu0 0.0
    %499 = vmatprep.subr.mxu0 0.0
    %500 = vmatpush1.msra.mxu0 0.0
    %501 = vmatprep.subr.mxu0 0.0
    %502 = vmatpush1.msra.mxu0 0.0
    %503 = vmatprep.subr.mxu0 0.0
    %504 = vmatpush1.msra.mxu0 0.0
    %505 = vmatprep.subr.mxu0 0.0
    %506 = vmatpush1.msra.mxu0 0.0
    %507 = vmatprep.subr.mxu0 0.0
    %508 = vmatpush1.msra.mxu0 0.0
    %509 = vmatprep.subr.mxu0 0.0
    %510 = vmatpush1.msra.mxu0 0.0
    %511 = vmatprep.subr.mxu0 0.0
    %512 = vmatpush1.msra.mxu0 0.0
    %513 = vmatprep.subr.mxu0 0.0
    %514 = vmatpush1.msra.mxu0 0.0
    %515 = vmatprep.subr.mxu0 0.0
    %516 = vmatpush1.msra.mxu0 0.0
    %517 = vmatprep.mubr.f32.mxu0 0.0
    %v518 = vand.u32 %v67, 4294901760
    %v519 = vsub.f32 %v67, %v518
    %v520 = vand.u32 %v519, 4294901760
    %521 = vmatmul.mubr.f32.gmra.mrb[0].mxu0 %v520
    %v522 = vpop.f32.mrb[0].mxu0
    %v523 = vadd.f32 %v434, %v522
    %v524 = vpop.f32.mrb[0].mxu0
    %525 = vdwg.mxu0
    %526 = vmatprep.subr.mxu0 0.0
    %v527 = vand.u32 %v68, 4294901760
    %v528 = vsub.f32 %v68, %v527
    %v529 = vand.u32 %v528, 4294901760
    %530 = vmatpush1.msra.mxu0 %v529
    %531 = vmatprep.subr.mxu0 0.0
    %v532 = vand.u32 %v69, 4294901760
    %v533 = vsub.f32 %v69, %v532
    %v534 = vand.u32 %v533, 4294901760
    %535 = vmatpush1.msra.mxu0 %v534
    %536 = vmatprep.subr.mxu0 0.0
    %v537 = vand.u32 %v70, 4294901760
    %v538 = vsub.f32 %v70, %v537
    %v539 = vand.u32 %v538, 4294901760
    %540 = vmatpush1.msra.mxu0 %v539
    %541 = vmatprep.subr.mxu0 0.0
    %v542 = vand.u32 %v71, 4294901760
    %v543 = vsub.f32 %v71, %v542
    %v544 = vand.u32 %v543, 4294901760
    %545 = vmatpush1.msra.mxu0 %v544
    %546 = vmatprep.subr.mxu0 0.0
    %v547 = vand.u32 %v72, 4294901760
    %v548 = vsub.f32 %v72, %v547
    %v549 = vand.u32 %v548, 4294901760
    %550 = vmatpush1.msra.mxu0 %v549
    %551 = vmatprep.subr.mxu0 0.0
    %v552 = vand.u32 %v73, 4294901760
    %v553 = vsub.f32 %v73, %v552
    %v554 = vand.u32 %v553, 4294901760
    %555 = vmatpush1.msra.mxu0 %v554
    %556 = vmatprep.subr.mxu0 0.0
    %v557 = vand.u32 %v74, 4294901760
    %v558 = vsub.f32 %v74, %v557
    %v559 = vand.u32 %v558, 4294901760
    %560 = vmatpush1.msra.mxu0 %v559
    %561 = vmatprep.subr.mxu0 0.0
    %v562 = vand.u32 %v75, 4294901760
    %v563 = vsub.f32 %v75, %v562
    %v564 = vand.u32 %v563, 4294901760
    %565 = vmatpush1.msra.mxu0 %v564
    %566 = vmatprep.subr.mxu0 0.0
    %v567 = vand.u32 %v76, 4294901760
    %v568 = vsub.f32 %v76, %v567
    %v569 = vand.u32 %v568, 4294901760
    %570 = vmatpush1.msra.mxu0 %v569
    %571 = vmatprep.subr.mxu0 0.0
    %v572 = vand.u32 %v77, 4294901760
    %v573 = vsub.f32 %v77, %v572
    %v574 = vand.u32 %v573, 4294901760
    %575 = vmatpush1.msra.mxu0 %v574
    %576 = vmatprep.subr.mxu0 0.0
    %v577 = vand.u32 %v78, 4294901760
    %v578 = vsub.f32 %v78, %v577
    %v579 = vand.u32 %v578, 4294901760
    %580 = vmatpush1.msra.mxu0 %v579
    %581 = vmatprep.subr.mxu0 0.0
    %v582 = vand.u32 %v79, 4294901760
    %v583 = vsub.f32 %v79, %v582
    %v584 = vand.u32 %v583, 4294901760
    %585 = vmatpush1.msra.mxu0 %v584
    %586 = vmatprep.subr.mxu0 0.0
    %v587 = vand.u32 %v80, 4294901760
    %v588 = vsub.f32 %v80, %v587
    %v589 = vand.u32 %v588, 4294901760
    %590 = vmatpush1.msra.mxu0 %v589
    %591 = vmatprep.subr.mxu0 0.0
    %v592 = vand.u32 %v81, 4294901760
    %v593 = vsub.f32 %v81, %v592
    %v594 = vand.u32 %v593, 4294901760
    %595 = vmatpush1.msra.mxu0 %v594
    %596 = vmatprep.subr.mxu0 0.0
    %v597 = vand.u32 %v82, 4294901760
    %v598 = vsub.f32 %v82, %v597
    %v599 = vand.u32 %v598, 4294901760
    %600 = vmatpush1.msra.mxu0 %v599
    %601 = vmatprep.subr.mxu0 0.0
    %v602 = vand.u32 %v83, 4294901760
    %v603 = vsub.f32 %v83, %v602
    %v604 = vand.u32 %v603, 4294901760
    %605 = vmatpush1.msra.mxu0 %v604
    %606 = vmatprep.subr.mxu0 0.0
    %607 = vmatpush1.msra.mxu0 0.0
    %608 = vmatprep.subr.mxu0 0.0
    %609 = vmatpush1.msra.mxu0 0.0
    %610 = vmatprep.subr.mxu0 0.0
    %611 = vmatpush1.msra.mxu0 0.0
    %612 = vmatprep.subr.mxu0 0.0
    %613 = vmatpush1.msra.mxu0 0.0
    %614 = vmatprep.subr.mxu0 0.0
    %615 = vmatpush1.msra.mxu0 0.0
    %616 = vmatprep.subr.mxu0 0.0
    %617 = vmatpush1.msra.mxu0 0.0
    %618 = vmatprep.subr.mxu0 0.0
    %619 = vmatpush1.msra.mxu0 0.0
    %620 = vmatprep.subr.mxu0 0.0
    %621 = vmatpush1.msra.mxu0 0.0
    %622 = vmatprep.subr.mxu0 0.0
    %623 = vmatpush1.msra.mxu0 0.0
    %624 = vmatprep.subr.mxu0 0.0
    %625 = vmatpush1.msra.mxu0 0.0
    %626 = vmatprep.subr.mxu0 0.0
    %627 = vmatpush1.msra.mxu0 0.0
    %628 = vmatprep.subr.mxu0 0.0
    %629 = vmatpush1.msra.mxu0 0.0
    %630 = vmatprep.subr.mxu0 0.0
    %631 = vmatpush1.msra.mxu0 0.0
    %632 = vmatprep.subr.mxu0 0.0
    %633 = vmatpush1.msra.mxu0 0.0
    %634 = vmatprep.subr.mxu0 0.0
    %635 = vmatpush1.msra.mxu0 0.0
    %636 = vmatprep.subr.mxu0 0.0
    %637 = vmatpush1.msra.mxu0 0.0
    %638 = vmatprep.mubr.f32.mxu0 0.0
    %v639 = vand.u32 %v67, 4294901760
    %640 = vmatmul.mubr.f32.gmra.mrb[0].mxu0 %v639
    %v641 = vpop.f32.mrb[0].mxu0
    %v642 = vadd.f32 %v523, %v641
    %v643 = vpop.f32.mrb[0].mxu0
    %644 = vdwg.mxu0
    %645 = vmatprep.subr.mxu0 0.0
    %v646 = vand.u32 %v68, 4294901760
    %647 = vmatpush1.msra.mxu0 %v646
    %648 = vmatprep.subr.mxu0 0.0
    %v649 = vand.u32 %v69, 4294901760
    %650 = vmatpush1.msra.mxu0 %v649
    %651 = vmatprep.subr.mxu0 0.0
    %v652 = vand.u32 %v70, 4294901760
    %653 = vmatpush1.msra.mxu0 %v652
    %654 = vmatprep.subr.mxu0 0.0
    %v655 = vand.u32 %v71, 4294901760
    %656 = vmatpush1.msra.mxu0 %v655
    %657 = vmatprep.subr.mxu0 0.0
    %v658 = vand.u32 %v72, 4294901760
    %659 = vmatpush1.msra.mxu0 %v658
    %660 = vmatprep.subr.mxu0 0.0
    %v661 = vand.u32 %v73, 4294901760
    %662 = vmatpush1.msra.mxu0 %v661
    %663 = vmatprep.subr.mxu0 0.0
    %v664 = vand.u32 %v74, 4294901760
    %665 = vmatpush1.msra.mxu0 %v664
    %666 = vmatprep.subr.mxu0 0.0
    %v667 = vand.u32 %v75, 4294901760
    %668 = vmatpush1.msra.mxu0 %v667
    %669 = vmatprep.subr.mxu0 0.0
    %v670 = vand.u32 %v76, 4294901760
    %671 = vmatpush1.msra.mxu0 %v670
    %672 = vmatprep.subr.mxu0 0.0
    %v673 = vand.u32 %v77, 4294901760
    %674 = vmatpush1.msra.mxu0 %v673
    %675 = vmatprep.subr.mxu0 0.0
    %v676 = vand.u32 %v78, 4294901760
    %677 = vmatpush1.msra.mxu0 %v676
    %678 = vmatprep.subr.mxu0 0.0
    %v679 = vand.u32 %v79, 4294901760
    %680 = vmatpush1.msra.mxu0 %v679
    %681 = vmatprep.subr.mxu0 0.0
    %v682 = vand.u32 %v80, 4294901760
    %683 = vmatpush1.msra.mxu0 %v682
    %684 = vmatprep.subr.mxu0 0.0
    %v685 = vand.u32 %v81, 4294901760
    %686 = vmatpush1.msra.mxu0 %v685
    %687 = vmatprep.subr.mxu0 0.0
    %v688 = vand.u32 %v82, 4294901760
    %689 = vmatpush1.msra.mxu0 %v688
    %690 = vmatprep.subr.mxu0 0.0
    %v691 = vand.u32 %v83, 4294901760
    %692 = vmatpush1.msra.mxu0 %v691
    %693 = vmatprep.subr.mxu0 0.0
    %694 = vmatpush1.msra.mxu0 0.0
    %695 = vmatprep.subr.mxu0 0.0
    %696 = vmatpush1.msra.mxu0 0.0
    %697 = vmatprep.subr.mxu0 0.0
    %698 = vmatpush1.msra.mxu0 0.0
    %699 = vmatprep.subr.mxu0 0.0
    %700 = vmatpush1.msra.mxu0 0.0
    %701 = vmatprep.subr.mxu0 0.0
    %702 = vmatpush1.msra.mxu0 0.0
    %703 = vmatprep.subr.mxu0 0.0
    %704 = vmatpush1.msra.mxu0 0.0
    %705 = vmatprep.subr.mxu0 0.0
    %706 = vmatpush1.msra.mxu0 0.0
    %707 = vmatprep.subr.mxu0 0.0
    %708 = vmatpush1.msra.mxu0 0.0
    %709 = vmatprep.subr.mxu0 0.0
    %710 = vmatpush1.msra.mxu0 0.0
    %711 = vmatprep.subr.mxu0 0.0
    %712 = vmatpush1.msra.mxu0 0.0
    %713 = vmatprep.subr.mxu0 0.0
    %714 = vmatpush1.msra.mxu0 0.0
    %715 = vmatprep.subr.mxu0 0.0
    %716 = vmatpush1.msra.mxu0 0.0
    %717 = vmatprep.subr.mxu0 0.0
    %718 = vmatpush1.msra.mxu0 0.0
    %719 = vmatprep.subr.mxu0 0.0
    %720 = vmatpush1.msra.mxu0 0.0
    %721 = vmatprep.subr.mxu0 0.0
    %722 = vmatpush1.msra.mxu0 0.0
    %723 = vmatprep.subr.mxu0 0.0
    %724 = vmatpush1.msra.mxu0 0.0
    %725 = vmatprep.mubr.f32.mxu0 0.0
    %v726 = vand.u32 %v67, 4294901760
    %727 = vmatmul.mubr.f32.gmra.mrb[0].mxu0 %v726
    %v728 = vpop.f32.mrb[0].mxu0
    %v729 = vadd.f32 %v642, %v728
    %v730 = vpop.f32.mrb[0].mxu0
    %731 = vdwg.mxu0
    %v732 = vmax.f32 %v729, 0.0
    %v733 = vld [vmem:[#allocation4] sm:$0xff]
    %v734 = vld [vmem:[#allocation4 + $0x8] sm:$0xff]
    %v735 = vld [vmem:[#allocation4 + $0x10] sm:$0xff]
    %v736 = vld [vmem:[#allocation4 + $0x18] sm:$0xff]
    %v737 = vld [vmem:[#allocation4 + $0x20] sm:$0xff]
    %v738 = vld [vmem:[#allocation4 + $0x28] sm:$0xff]
    %v739 = vld [vmem:[#allocation4 + $0x30] sm:$0xff]
    %v740 = vld [vmem:[#allocation4 + $0x38] sm:$0xff]
    %v741 = vld [vmem:[#allocation4 + $0x40] sm:$0xff]
    %v742 = vld [vmem:[#allocation4 + $0x48] sm:$0xff]
    %v743 = vld [vmem:[#allocation4 + $0x50] sm:$0xff]
    %v744 = vld [vmem:[#allocation4 + $0x58] sm:$0xff]
    %v745 = vld [vmem:[#allocation4 + $0x60] sm:$0xff]
    %v746 = vld [vmem:[#allocation4 + $0x68] sm:$0xff]
    %v747 = vld [vmem:[#allocation4 + $0x70] sm:$0xff]
    %v748 = vld [vmem:[#allocation4 + $0x78] sm:$0xff]
    %v749 = vld [vmem:[%s4] sm:$0x1]
    %v751 = vlaneseq
    %v752 = vshrl.u32 %v751, 7
    %v753 = vsub.s32 0, %v752
    %v754 = vrot.slane %v749, %v753
    %756 = vmatprep.subr.mxu0 0.0
    %v757 = vand.u32 %v733, 4294901760
    %758 = vmatpush1.msra.mxu0 %v757
    %759 = vmatprep.subr.mxu0 0.0
    %v760 = vand.u32 %v734, 4294901760
    %761 = vmatpush1.msra.mxu0 %v760
    %762 = vmatprep.subr.mxu0 0.0
    %v763 = vand.u32 %v735, 4294901760
    %764 = vmatpush1.msra.mxu0 %v763
    %765 = vmatprep.subr.mxu0 0.0
    %v766 = vand.u32 %v736, 4294901760
    %767 = vmatpush1.msra.mxu0 %v766
    %768 = vmatprep.subr.mxu0 0.0
    %v769 = vand.u32 %v737, 4294901760
    %770 = vmatpush1.msra.mxu0 %v769
    %771 = vmatprep.subr.mxu0 0.0
    %v772 = vand.u32 %v738, 4294901760
    %773 = vmatpush1.msra.mxu0 %v772
    %774 = vmatprep.subr.mxu0 0.0
    %v775 = vand.u32 %v739, 4294901760
    %776 = vmatpush1.msra.mxu0 %v775
    %777 = vmatprep.subr.mxu0 0.0
    %v778 = vand.u32 %v740, 4294901760
    %779 = vmatpush1.msra.mxu0 %v778
    %780 = vmatprep.subr.mxu0 0.0
    %v781 = vand.u32 %v741, 4294901760
    %782 = vmatpush1.msra.mxu0 %v781
    %783 = vmatprep.subr.mxu0 0.0
    %v784 = vand.u32 %v742, 4294901760
    %785 = vmatpush1.msra.mxu0 %v784
    %786 = vmatprep.subr.mxu0 0.0
    %v787 = vand.u32 %v743, 4294901760
    %788 = vmatpush1.msra.mxu0 %v787
    %789 = vmatprep.subr.mxu0 0.0
    %v790 = vand.u32 %v744, 4294901760
    %791 = vmatpush1.msra.mxu0 %v790
    %792 = vmatprep.subr.mxu0 0.0
    %v793 = vand.u32 %v745, 4294901760
    %794 = vmatpush1.msra.mxu0 %v793
    %795 = vmatprep.subr.mxu0 0.0
    %v796 = vand.u32 %v746, 4294901760
    %797 = vmatpush1.msra.mxu0 %v796
    %798 = vmatprep.subr.mxu0 0.0
    %v799 = vand.u32 %v747, 4294901760
    %800 = vmatpush1.msra.mxu0 %v799
    %801 = vmatprep.subr.mxu0 0.0
    %v802 = vand.u32 %v748, 4294901760
    %803 = vmatpush1.msra.mxu0 %v802
    %804 = vmatprep.subr.mxu0 0.0
    %805 = vmatpush1.msra.mxu0 0.0
    %806 = vmatprep.subr.mxu0 0.0
    %807 = vmatpush1.msra.mxu0 0.0
    %808 = vmatprep.subr.mxu0 0.0
    %809 = vmatpush1.msra.mxu0 0.0
    %810 = vmatprep.subr.mxu0 0.0
    %811 = vmatpush1.msra.mxu0 0.0
    %812 = vmatprep.subr.mxu0 0.0
    %813 = vmatpush1.msra.mxu0 0.0
    %814 = vmatprep.subr.mxu0 0.0
    %815 = vmatpush1.msra.mxu0 0.0
    %816 = vmatprep.subr.mxu0 0.0
    %817 = vmatpush1.msra.mxu0 0.0
    %818 = vmatprep.subr.mxu0 0.0
    %819 = vmatpush1.msra.mxu0 0.0
    %820 = vmatprep.subr.mxu0 0.0
    %821 = vmatpush1.msra.mxu0 0.0
    %822 = vmatprep.subr.mxu0 0.0
    %823 = vmatpush1.msra.mxu0 0.0
    %824 = vmatprep.subr.mxu0 0.0
    %825 = vmatpush1.msra.mxu0 0.0
    %826 = vmatprep.subr.mxu0 0.0
    %827 = vmatpush1.msra.mxu0 0.0
    %828 = vmatprep.subr.mxu0 0.0
    %829 = vmatpush1.msra.mxu0 0.0
    %830 = vmatprep.subr.mxu0 0.0
    %831 = vmatpush1.msra.mxu0 0.0
    %832 = vmatprep.subr.mxu0 0.0
    %833 = vmatpush1.msra.mxu0 0.0
    %834 = vmatprep.subr.mxu0 0.0
    %835 = vmatpush1.msra.mxu0 0.0
    %836 = vmatprep.mubr.f32.mxu0 0.0
    %v837 = vand.u32 %v732, 4294901760
    %v838 = vsub.f32 %v732, %v837
    %v839 = vand.u32 %v838, 4294901760
    %v840 = vsub.f32 %v838, %v839
    %v841 = vand.u32 %v840, 4294901760
    %842 = vmatmul.mubr.f32.gmra.mrb[0].mxu0 %v841
    %v843 = vpop.f32.mrb[0].mxu0
    %v844 = vadd.f32 %v754, %v843
    %v845 = vpop.f32.mrb[0].mxu0
    %846 = vdwg.mxu0
    %847 = vmatprep.subr.mxu0 0.0
    %v848 = vand.u32 %v733, 4294901760
    %v849 = vsub.f32 %v733, %v848
    %v850 = vand.u32 %v849, 4294901760
    %v851 = vsub.f32 %v849, %v850
    %v852 = vand.u32 %v851, 4294901760
    %853 = vmatpush1.msra.mxu0 %v852
    %854 = vmatprep.subr.mxu0 0.0
    %v855 = vand.u32 %v734, 4294901760
    %v856 = vsub.f32 %v734, %v855
    %v857 = vand.u32 %v856, 4294901760
    %v858 = vsub.f32 %v856, %v857
    %v859 = vand.u32 %v858, 4294901760
    %860 = vmatpush1.msra.mxu0 %v859
    %861 = vmatprep.subr.mxu0 0.0
    %v862 = vand.u32 %v735, 4294901760
    %v863 = vsub.f32 %v735, %v862
    %v864 = vand.u32 %v863, 4294901760
    %v865 = vsub.f32 %v863, %v864
    %v866 = vand.u32 %v865, 4294901760
    %867 = vmatpush1.msra.mxu0 %v866
    %868 = vmatprep.subr.mxu0 0.0
    %v869 = vand.u32 %v736, 4294901760
    %v870 = vsub.f32 %v736, %v869
    %v871 = vand.u32 %v870, 4294901760
    %v872 = vsub.f32 %v870, %v871
    %v873 = vand.u32 %v872, 4294901760
    %874 = vmatpush1.msra.mxu0 %v873
    %875 = vmatprep.subr.mxu0 0.0
    %v876 = vand.u32 %v737, 4294901760
    %v877 = vsub.f32 %v737, %v876
    %v878 = vand.u32 %v877, 4294901760
    %v879 = vsub.f32 %v877, %v878
    %v880 = vand.u32 %v879, 4294901760
    %881 = vmatpush1.msra.mxu0 %v880
    %882 = vmatprep.subr.mxu0 0.0
    %v883 = vand.u32 %v738, 4294901760
    %v884 = vsub.f32 %v738, %v883
    %v885 = vand.u32 %v884, 4294901760
    %v886 = vsub.f32 %v884, %v885
    %v887 = vand.u32 %v886, 4294901760
    %888 = vmatpush1.msra.mxu0 %v887
    %889 = vmatprep.subr.mxu0 0.0
    %v890 = vand.u32 %v739, 4294901760
    %v891 = vsub.f32 %v739, %v890
    %v892 = vand.u32 %v891, 4294901760
    %v893 = vsub.f32 %v891, %v892
    %v894 = vand.u32 %v893, 4294901760
    %895 = vmatpush1.msra.mxu0 %v894
    %896 = vmatprep.subr.mxu0 0.0
    %v897 = vand.u32 %v740, 4294901760
    %v898 = vsub.f32 %v740, %v897
    %v899 = vand.u32 %v898, 4294901760
    %v900 = vsub.f32 %v898, %v899
    %v901 = vand.u32 %v900, 4294901760
    %902 = vmatpush1.msra.mxu0 %v901
    %903 = vmatprep.subr.mxu0 0.0
    %v904 = vand.u32 %v741, 4294901760
    %v905 = vsub.f32 %v741, %v904
    %v906 = vand.u32 %v905, 4294901760
    %v907 = vsub.f32 %v905, %v906
    %v908 = vand.u32 %v907, 4294901760
    %909 = vmatpush1.msra.mxu0 %v908
    %910 = vmatprep.subr.mxu0 0.0
    %v911 = vand.u32 %v742, 4294901760
    %v912 = vsub.f32 %v742, %v911
    %v913 = vand.u32 %v912, 4294901760
    %v914 = vsub.f32 %v912, %v913
    %v915 = vand.u32 %v914, 4294901760
    %916 = vmatpush1.msra.mxu0 %v915
    %917 = vmatprep.subr.mxu0 0.0
    %v918 = vand.u32 %v743, 4294901760
    %v919 = vsub.f32 %v743, %v918
    %v920 = vand.u32 %v919, 4294901760
    %v921 = vsub.f32 %v919, %v920
    %v922 = vand.u32 %v921, 4294901760
    %923 = vmatpush1.msra.mxu0 %v922
    %924 = vmatprep.subr.mxu0 0.0
    %v925 = vand.u32 %v744, 4294901760
    %v926 = vsub.f32 %v744, %v925
    %v927 = vand.u32 %v926, 4294901760
    %v928 = vsub.f32 %v926, %v927
    %v929 = vand.u32 %v928, 4294901760
    %930 = vmatpush1.msra.mxu0 %v929
    %931 = vmatprep.subr.mxu0 0.0
    %v932 = vand.u32 %v745, 4294901760
    %v933 = vsub.f32 %v745, %v932
    %v934 = vand.u32 %v933, 4294901760
    %v935 = vsub.f32 %v933, %v934
    %v936 = vand.u32 %v935, 4294901760
    %937 = vmatpush1.msra.mxu0 %v936
    %938 = vmatprep.subr.mxu0 0.0
    %v939 = vand.u32 %v746, 4294901760
    %v940 = vsub.f32 %v746, %v939
    %v941 = vand.u32 %v940, 4294901760
    %v942 = vsub.f32 %v940, %v941
    %v943 = vand.u32 %v942, 4294901760
    %944 = vmatpush1.msra.mxu0 %v943
    %945 = vmatprep.subr.mxu0 0.0
    %v946 = vand.u32 %v747, 4294901760
    %v947 = vsub.f32 %v747, %v946
    %v948 = vand.u32 %v947, 4294901760
    %v949 = vsub.f32 %v947, %v948
    %v950 = vand.u32 %v949, 4294901760
    %951 = vmatpush1.msra.mxu0 %v950
    %952 = vmatprep.subr.mxu0 0.0
    %v953 = vand.u32 %v748, 4294901760
    %v954 = vsub.f32 %v748, %v953
    %v955 = vand.u32 %v954, 4294901760
    %v956 = vsub.f32 %v954, %v955
    %v957 = vand.u32 %v956, 4294901760
    %958 = vmatpush1.msra.mxu0 %v957
    %959 = vmatprep.subr.mxu0 0.0
    %960 = vmatpush1.msra.mxu0 0.0
    %961 = vmatprep.subr.mxu0 0.0
    %962 = vmatpush1.msra.mxu0 0.0
    %963 = vmatprep.subr.mxu0 0.0
    %964 = vmatpush1.msra.mxu0 0.0
    %965 = vmatprep.subr.mxu0 0.0
    %966 = vmatpush1.msra.mxu0 0.0
    %967 = vmatprep.subr.mxu0 0.0
    %968 = vmatpush1.msra.mxu0 0.0
    %969 = vmatprep.subr.mxu0 0.0
    %970 = vmatpush1.msra.mxu0 0.0
    %971 = vmatprep.subr.mxu0 0.0
    %972 = vmatpush1.msra.mxu0 0.0
    %973 = vmatprep.subr.mxu0 0.0
    %974 = vmatpush1.msra.mxu0 0.0
    %975 = vmatprep.subr.mxu0 0.0
    %976 = vmatpush1.msra.mxu0 0.0
    %977 = vmatprep.subr.mxu0 0.0
    %978 = vmatpush1.msra.mxu0 0.0
    %979 = vmatprep.subr.mxu0 0.0
    %980 = vmatpush1.msra.mxu0 0.0
    %981 = vmatprep.subr.mxu0 0.0
    %982 = vmatpush1.msra.mxu0 0.0
    %983 = vmatprep.subr.mxu0 0.0
    %984 = vmatpush1.msra.mxu0 0.0
    %985 = vmatprep.subr.mxu0 0.0
    %986 = vmatpush1.msra.mxu0 0.0
    %987 = vmatprep.subr.mxu0 0.0
    %988 = vmatpush1.msra.mxu0 0.0
    %989 = vmatprep.subr.mxu0 0.0
    %990 = vmatpush1.msra.mxu0 0.0
    %991 = vmatprep.mubr.f32.mxu0 0.0
    %v992 = vand.u32 %v732, 4294901760
    %993 = vmatmul.mubr.f32.gmra.mrb[0].mxu0 %v992
    %v994 = vpop.f32.mrb[0].mxu0
    %v995 = vadd.f32 %v844, %v994
    %v996 = vpop.f32.mrb[0].mxu0
    %997 = vdwg.mxu0
    %998 = vmatprep.subr.mxu0 0.0
    %v999 = vand.u32 %v733, 4294901760
    %v1000 = vsub.f32 %v733, %v999
    %1001 = vmatpush1.msra.mxu0 %v1000
    %1002 = vmatprep.subr.mxu0 0.0
    %v1003 = vand.u32 %v734, 4294901760
    %v1004 = vsub.f32 %v734, %v1003
    %1005 = vmatpush1.msra.mxu0 %v1004
    %1006 = vmatprep.subr.mxu0 0.0
    %v1007 = vand.u32 %v735, 4294901760
    %v1008 = vsub.f32 %v735, %v1007
    %1009 = vmatpush1.msra.mxu0 %v1008
    %1010 = vmatprep.subr.mxu0 0.0
    %v1011 = vand.u32 %v736, 4294901760
    %v1012 = vsub.f32 %v736, %v1011
    %1013 = vmatpush1.msra.mxu0 %v1012
    %1014 = vmatprep.subr.mxu0 0.0
    %v1015 = vand.u32 %v737, 4294901760
    %v1016 = vsub.f32 %v737, %v1015
    %1017 = vmatpush1.msra.mxu0 %v1016
    %1018 = vmatprep.subr.mxu0 0.0
    %v1019 = vand.u32 %v738, 4294901760
    %v1020 = vsub.f32 %v738, %v1019
    %1021 = vmatpush1.msra.mxu0 %v1020
    %1022 = vmatprep.subr.mxu0 0.0
    %v1023 = vand.u32 %v739, 4294901760
    %v1024 = vsub.f32 %v739, %v1023
    %1025 = vmatpush1.msra.mxu0 %v1024
    %1026 = vmatprep.subr.mxu0 0.0
    %v1027 = vand.u32 %v740, 4294901760
    %v1028 = vsub.f32 %v740, %v1027
    %1029 = vmatpush1.msra.mxu0 %v1028
    %1030 = vmatprep.subr.mxu0 0.0
    %v1031 = vand.u32 %v741, 4294901760
    %v1032 = vsub.f32 %v741, %v1031
    %1033 = vmatpush1.msra.mxu0 %v1032
    %1034 = vmatprep.subr.mxu0 0.0
    %v1035 = vand.u32 %v742, 4294901760
    %v1036 = vsub.f32 %v742, %v1035
    %1037 = vmatpush1.msra.mxu0 %v1036
    %1038 = vmatprep.subr.mxu0 0.0
    %v1039 = vand.u32 %v743, 4294901760
    %v1040 = vsub.f32 %v743, %v1039
    %1041 = vmatpush1.msra.mxu0 %v1040
    %1042 = vmatprep.subr.mxu0 0.0
    %v1043 = vand.u32 %v744, 4294901760
    %v1044 = vsub.f32 %v744, %v1043
    %1045 = vmatpush1.msra.mxu0 %v1044
    %1046 = vmatprep.subr.mxu0 0.0
    %v1047 = vand.u32 %v745, 4294901760
    %v1048 = vsub.f32 %v745, %v1047
    %1049 = vmatpush1.msra.mxu0 %v1048
    %1050 = vmatprep.subr.mxu0 0.0
    %v1051 = vand.u32 %v746, 4294901760
    %v1052 = vsub.f32 %v746, %v1051
    %1053 = vmatpush1.msra.mxu0 %v1052
    %1054 = vmatprep.subr.mxu0 0.0
    %v1055 = vand.u32 %v747, 4294901760
    %v1056 = vsub.f32 %v747, %v1055
    %1057 = vmatpush1.msra.mxu0 %v1056
    %1058 = vmatprep.subr.mxu0 0.0
    %v1059 = vand.u32 %v748, 4294901760
    %v1060 = vsub.f32 %v748, %v1059
    %1061 = vmatpush1.msra.mxu0 %v1060
    %1062 = vmatprep.subr.mxu0 0.0
    %1063 = vmatpush1.msra.mxu0 0.0
    %1064 = vmatprep.subr.mxu0 0.0
    %1065 = vmatpush1.msra.mxu0 0.0
    %1066 = vmatprep.subr.mxu0 0.0
    %1067 = vmatpush1.msra.mxu0 0.0
    %1068 = vmatprep.subr.mxu0 0.0
    %1069 = vmatpush1.msra.mxu0 0.0
    %1070 = vmatprep.subr.mxu0 0.0
    %1071 = vmatpush1.msra.mxu0 0.0
    %1072 = vmatprep.subr.mxu0 0.0
    %1073 = vmatpush1.msra.mxu0 0.0
    %1074 = vmatprep.subr.mxu0 0.0
    %1075 = vmatpush1.msra.mxu0 0.0
    %1076 = vmatprep.subr.mxu0 0.0
    %1077 = vmatpush1.msra.mxu0 0.0
    %1078 = vmatprep.subr.mxu0 0.0
    %1079 = vmatpush1.msra.mxu0 0.0
    %1080 = vmatprep.subr.mxu0 0.0
    %1081 = vmatpush1.msra.mxu0 0.0
    %1082 = vmatprep.subr.mxu0 0.0
    %1083 = vmatpush1.msra.mxu0 0.0
    %1084 = vmatprep.subr.mxu0 0.0
    %1085 = vmatpush1.msra.mxu0 0.0
    %1086 = vmatprep.subr.mxu0 0.0
    %1087 = vmatpush1.msra.mxu0 0.0
    %1088 = vmatprep.subr.mxu0 0.0
    %1089 = vmatpush1.msra.mxu0 0.0
    %1090 = vmatprep.subr.mxu0 0.0
    %1091 = vmatpush1.msra.mxu0 0.0
    %1092 = vmatprep.subr.mxu0 0.0
    %1093 = vmatpush1.msra.mxu0 0.0
    %1094 = vmatprep.mubr.f32.mxu0 0.0
    %v1095 = vand.u32 %v732, 4294901760
    %v1096 = vsub.f32 %v732, %v1095
    %1097 = vmatmul.mubr.f32.gmra.mrb[0].mxu0 %v1096
    %v1098 = vpop.f32.mrb[0].mxu0
    %v1099 = vadd.f32 %v995, %v1098
    %v1100 = vpop.f32.mrb[0].mxu0
    %1101 = vdwg.mxu0
    %1102 = vmatprep.subr.mxu0 0.0
    %v1103 = vand.u32 %v733, 4294901760
    %1104 = vmatpush1.msra.mxu0 %v1103
    %1105 = vmatprep.subr.mxu0 0.0
    %v1106 = vand.u32 %v734, 4294901760
    %1107 = vmatpush1.msra.mxu0 %v1106
    %1108 = vmatprep.subr.mxu0 0.0
    %v1109 = vand.u32 %v735, 4294901760
    %1110 = vmatpush1.msra.mxu0 %v1109
    %1111 = vmatprep.subr.mxu0 0.0
    %v1112 = vand.u32 %v736, 4294901760
    %1113 = vmatpush1.msra.mxu0 %v1112
    %1114 = vmatprep.subr.mxu0 0.0
    %v1115 = vand.u32 %v737, 4294901760
    %1116 = vmatpush1.msra.mxu0 %v1115
    %1117 = vmatprep.subr.mxu0 0.0
    %v1118 = vand.u32 %v738, 4294901760
    %1119 = vmatpush1.msra.mxu0 %v1118
    %1120 = vmatprep.subr.mxu0 0.0
    %v1121 = vand.u32 %v739, 4294901760
    %1122 = vmatpush1.msra.mxu0 %v1121
    %1123 = vmatprep.subr.mxu0 0.0
    %v1124 = vand.u32 %v740, 4294901760
    %1125 = vmatpush1.msra.mxu0 %v1124
    %1126 = vmatprep.subr.mxu0 0.0
    %v1127 = vand.u32 %v741, 4294901760
    %1128 = vmatpush1.msra.mxu0 %v1127
    %1129 = vmatprep.subr.mxu0 0.0
    %v1130 = vand.u32 %v742, 4294901760
    %1131 = vmatpush1.msra.mxu0 %v1130
    %1132 = vmatprep.subr.mxu0 0.0
    %v1133 = vand.u32 %v743, 4294901760
    %1134 = vmatpush1.msra.mxu0 %v1133
    %1135 = vmatprep.subr.mxu0 0.0
    %v1136 = vand.u32 %v744, 4294901760
    %1137 = vmatpush1.msra.mxu0 %v1136
    %1138 = vmatprep.subr.mxu0 0.0
    %v1139 = vand.u32 %v745, 4294901760
    %1140 = vmatpush1.msra.mxu0 %v1139
    %1141 = vmatprep.subr.mxu0 0.0
    %v1142 = vand.u32 %v746, 4294901760
    %1143 = vmatpush1.msra.mxu0 %v1142
    %1144 = vmatprep.subr.mxu0 0.0
    %v1145 = vand.u32 %v747, 4294901760
    %1146 = vmatpush1.msra.mxu0 %v1145
    %1147 = vmatprep.subr.mxu0 0.0
    %v1148 = vand.u32 %v748, 4294901760
    %1149 = vmatpush1.msra.mxu0 %v1148
    %1150 = vmatprep.subr.mxu0 0.0
    %1151 = vmatpush1.msra.mxu0 0.0
    %1152 = vmatprep.subr.mxu0 0.0
    %1153 = vmatpush1.msra.mxu0 0.0
    %1154 = vmatprep.subr.mxu0 0.0
    %1155 = vmatpush1.msra.mxu0 0.0
    %1156 = vmatprep.subr.mxu0 0.0
    %1157 = vmatpush1.msra.mxu0 0.0
    %1158 = vmatprep.subr.mxu0 0.0
    %1159 = vmatpush1.msra.mxu0 0.0
    %1160 = vmatprep.subr.mxu0 0.0
    %1161 = vmatpush1.msra.mxu0 0.0
    %1162 = vmatprep.subr.mxu0 0.0
    %1163 = vmatpush1.msra.mxu0 0.0
    %1164 = vmatprep.subr.mxu0 0.0
    %1165 = vmatpush1.msra.mxu0 0.0
    %1166 = vmatprep.subr.mxu0 0.0
    %1167 = vmatpush1.msra.mxu0 0.0
    %1168 = vmatprep.subr.mxu0 0.0
    %1169 = vmatpush1.msra.mxu0 0.0
    %1170 = vmatprep.subr.mxu0 0.0
    %1171 = vmatpush1.msra.mxu0 0.0
    %1172 = vmatprep.subr.mxu0 0.0
    %1173 = vmatpush1.msra.mxu0 0.0
    %1174 = vmatprep.subr.mxu0 0.0
    %1175 = vmatpush1.msra.mxu0 0.0
    %1176 = vmatprep.subr.mxu0 0.0
    %1177 = vmatpush1.msra.mxu0 0.0
    %1178 = vmatprep.subr.mxu0 0.0
    %1179 = vmatpush1.msra.mxu0 0.0
    %1180 = vmatprep.subr.mxu0 0.0
    %1181 = vmatpush1.msra.mxu0 0.0
    %1182 = vmatprep.mubr.f32.mxu0 0.0
    %v1183 = vand.u32 %v732, 4294901760
    %v1184 = vsub.f32 %v732, %v1183
    %v1185 = vand.u32 %v1184, 4294901760
    %1186 = vmatmul.mubr.f32.gmra.mrb[0].mxu0 %v1185
    %v1187 = vpop.f32.mrb[0].mxu0
    %v1188 = vadd.f32 %v1099, %v1187
    %v1189 = vpop.f32.mrb[0].mxu0
    %1190 = vdwg.mxu0
    %1191 = vmatprep.subr.mxu0 0.0
    %v1192 = vand.u32 %v733, 4294901760
    %v1193 = vsub.f32 %v733, %v1192
    %v1194 = vand.u32 %v1193, 4294901760
    %1195 = vmatpush1.msra.mxu0 %v1194
    %1196 = vmatprep.subr.mxu0 0.0
    %v1197 = vand.u32 %v734, 4294901760
    %v1198 = vsub.f32 %v734, %v1197
    %v1199 = vand.u32 %v1198, 4294901760
    %1200 = vmatpush1.msra.mxu0 %v1199
    %1201 = vmatprep.subr.mxu0 0.0
    %v1202 = vand.u32 %v735, 4294901760
    %v1203 = vsub.f32 %v735, %v1202
    %v1204 = vand.u32 %v1203, 4294901760
    %1205 = vmatpush1.msra.mxu0 %v1204
    %1206 = vmatprep.subr.mxu0 0.0
    %v1207 = vand.u32 %v736, 4294901760
    %v1208 = vsub.f32 %v736, %v1207
    %v1209 = vand.u32 %v1208, 4294901760
    %1210 = vmatpush1.msra.mxu0 %v1209
    %1211 = vmatprep.subr.mxu0 0.0
    %v1212 = vand.u32 %v737, 4294901760
    %v1213 = vsub.f32 %v737, %v1212
    %v1214 = vand.u32 %v1213, 4294901760
    %1215 = vmatpush1.msra.mxu0 %v1214
    %1216 = vmatprep.subr.mxu0 0.0
    %v1217 = vand.u32 %v738, 4294901760
    %v1218 = vsub.f32 %v738, %v1217
    %v1219 = vand.u32 %v1218, 4294901760
    %1220 = vmatpush1.msra.mxu0 %v1219
    %1221 = vmatprep.subr.mxu0 0.0
    %v1222 = vand.u32 %v739, 4294901760
    %v1223 = vsub.f32 %v739, %v1222
    %v1224 = vand.u32 %v1223, 4294901760
    %1225 = vmatpush1.msra.mxu0 %v1224
    %1226 = vmatprep.subr.mxu0 0.0
    %v1227 = vand.u32 %v740, 4294901760
    %v1228 = vsub.f32 %v740, %v1227
    %v1229 = vand.u32 %v1228, 4294901760
    %1230 = vmatpush1.msra.mxu0 %v1229
    %1231 = vmatprep.subr.mxu0 0.0
    %v1232 = vand.u32 %v741, 4294901760
    %v1233 = vsub.f32 %v741, %v1232
    %v1234 = vand.u32 %v1233, 4294901760
    %1235 = vmatpush1.msra.mxu0 %v1234
    %1236 = vmatprep.subr.mxu0 0.0
    %v1237 = vand.u32 %v742, 4294901760
    %v1238 = vsub.f32 %v742, %v1237
    %v1239 = vand.u32 %v1238, 4294901760
    %1240 = vmatpush1.msra.mxu0 %v1239
    %1241 = vmatprep.subr.mxu0 0.0
    %v1242 = vand.u32 %v743, 4294901760
    %v1243 = vsub.f32 %v743, %v1242
    %v1244 = vand.u32 %v1243, 4294901760
    %1245 = vmatpush1.msra.mxu0 %v1244
    %1246 = vmatprep.subr.mxu0 0.0
    %v1247 = vand.u32 %v744, 4294901760
    %v1248 = vsub.f32 %v744, %v1247
    %v1249 = vand.u32 %v1248, 4294901760
    %1250 = vmatpush1.msra.mxu0 %v1249
    %1251 = vmatprep.subr.mxu0 0.0
    %v1252 = vand.u32 %v745, 4294901760
    %v1253 = vsub.f32 %v745, %v1252
    %v1254 = vand.u32 %v1253, 4294901760
    %1255 = vmatpush1.msra.mxu0 %v1254
    %1256 = vmatprep.subr.mxu0 0.0
    %v1257 = vand.u32 %v746, 4294901760
    %v1258 = vsub.f32 %v746, %v1257
    %v1259 = vand.u32 %v1258, 4294901760
    %1260 = vmatpush1.msra.mxu0 %v1259
    %1261 = vmatprep.subr.mxu0 0.0
    %v1262 = vand.u32 %v747, 4294901760
    %v1263 = vsub.f32 %v747, %v1262
    %v1264 = vand.u32 %v1263, 4294901760
    %1265 = vmatpush1.msra.mxu0 %v1264
    %1266 = vmatprep.subr.mxu0 0.0
    %v1267 = vand.u32 %v748, 4294901760
    %v1268 = vsub.f32 %v748, %v1267
    %v1269 = vand.u32 %v1268, 4294901760
    %1270 = vmatpush1.msra.mxu0 %v1269
    %1271 = vmatprep.subr.mxu0 0.0
    %1272 = vmatpush1.msra.mxu0 0.0
    %1273 = vmatprep.subr.mxu0 0.0
    %1274 = vmatpush1.msra.mxu0 0.0
    %1275 = vmatprep.subr.mxu0 0.0
    %1276 = vmatpush1.msra.mxu0 0.0
    %1277 = vmatprep.subr.mxu0 0.0
    %1278 = vmatpush1.msra.mxu0 0.0
    %1279 = vmatprep.subr.mxu0 0.0
    %1280 = vmatpush1.msra.mxu0 0.0
    %1281 = vmatprep.subr.mxu0 0.0
    %1282 = vmatpush1.msra.mxu0 0.0
    %1283 = vmatprep.subr.mxu0 0.0
    %1284 = vmatpush1.msra.mxu0 0.0
    %1285 = vmatprep.subr.mxu0 0.0
    %1286 = vmatpush1.msra.mxu0 0.0
    %1287 = vmatprep.subr.mxu0 0.0
    %1288 = vmatpush1.msra.mxu0 0.0
    %1289 = vmatprep.subr.mxu0 0.0
    %1290 = vmatpush1.msra.mxu0 0.0
    %1291 = vmatprep.subr.mxu0 0.0
    %1292 = vmatpush1.msra.mxu0 0.0
    %1293 = vmatprep.subr.mxu0 0.0
    %1294 = vmatpush1.msra.mxu0 0.0
    %1295 = vmatprep.subr.mxu0 0.0
    %1296 = vmatpush1.msra.mxu0 0.0
    %1297 = vmatprep.subr.mxu0 0.0
    %1298 = vmatpush1.msra.mxu0 0.0
    %1299 = vmatprep.subr.mxu0 0.0
    %1300 = vmatpush1.msra.mxu0 0.0
    %1301 = vmatprep.subr.mxu0 0.0
    %1302 = vmatpush1.msra.mxu0 0.0
    %1303 = vmatprep.mubr.f32.mxu0 0.0
    %v1304 = vand.u32 %v732, 4294901760
    %1305 = vmatmul.mubr.f32.gmra.mrb[0].mxu0 %v1304
    %v1306 = vpop.f32.mrb[0].mxu0
    %v1307 = vadd.f32 %v1188, %v1306
    %v1308 = vpop.f32.mrb[0].mxu0
    %1309 = vdwg.mxu0
    %1310 = vmatprep.subr.mxu0 0.0
    %v1311 = vand.u32 %v733, 4294901760
    %1312 = vmatpush1.msra.mxu0 %v1311
    %1313 = vmatprep.subr.mxu0 0.0
    %v1314 = vand.u32 %v734, 4294901760
    %1315 = vmatpush1.msra.mxu0 %v1314
    %1316 = vmatprep.subr.mxu0 0.0
    %v1317 = vand.u32 %v735, 4294901760
    %1318 = vmatpush1.msra.mxu0 %v1317
    %1319 = vmatprep.subr.mxu0 0.0
    %v1320 = vand.u32 %v736, 4294901760
    %1321 = vmatpush1.msra.mxu0 %v1320
    %1322 = vmatprep.subr.mxu0 0.0
    %v1323 = vand.u32 %v737, 4294901760
    %1324 = vmatpush1.msra.mxu0 %v1323
    %1325 = vmatprep.subr.mxu0 0.0
    %v1326 = vand.u32 %v738, 4294901760
    %1327 = vmatpush1.msra.mxu0 %v1326
    %1328 = vmatprep.subr.mxu0 0.0
    %v1329 = vand.u32 %v739, 4294901760
    %1330 = vmatpush1.msra.mxu0 %v1329
    %1331 = vmatprep.subr.mxu0 0.0
    %v1332 = vand.u32 %v740, 4294901760
    %1333 = vmatpush1.msra.mxu0 %v1332
    %1334 = vmatprep.subr.mxu0 0.0
    %v1335 = vand.u32 %v741, 4294901760
    %1336 = vmatpush1.msra.mxu0 %v1335
    %1337 = vmatprep.subr.mxu0 0.0
    %v1338 = vand.u32 %v742, 4294901760
    %1339 = vmatpush1.msra.mxu0 %v1338
    %1340 = vmatprep.subr.mxu0 0.0
    %v1341 = vand.u32 %v743, 4294901760
    %1342 = vmatpush1.msra.mxu0 %v1341
    %1343 = vmatprep.subr.mxu0 0.0
    %v1344 = vand.u32 %v744, 4294901760
    %1345 = vmatpush1.msra.mxu0 %v1344
    %1346 = vmatprep.subr.mxu0 0.0
    %v1347 = vand.u32 %v745, 4294901760
    %1348 = vmatpush1.msra.mxu0 %v1347
    %1349 = vmatprep.subr.mxu0 0.0
    %v1350 = vand.u32 %v746, 4294901760
    %1351 = vmatpush1.msra.mxu0 %v1350
    %1352 = vmatprep.subr.mxu0 0.0
    %v1353 = vand.u32 %v747, 4294901760
    %1354 = vmatpush1.msra.mxu0 %v1353
    %1355 = vmatprep.subr.mxu0 0.0
    %v1356 = vand.u32 %v748, 4294901760
    %1357 = vmatpush1.msra.mxu0 %v1356
    %1358 = vmatprep.subr.mxu0 0.0
    %1359 = vmatpush1.msra.mxu0 0.0
    %1360 = vmatprep.subr.mxu0 0.0
    %1361 = vmatpush1.msra.mxu0 0.0
    %1362 = vmatprep.subr.mxu0 0.0
    %1363 = vmatpush1.msra.mxu0 0.0
    %1364 = vmatprep.subr.mxu0 0.0
    %1365 = vmatpush1.msra.mxu0 0.0
    %1366 = vmatprep.subr.mxu0 0.0
    %1367 = vmatpush1.msra.mxu0 0.0
    %1368 = vmatprep.subr.mxu0 0.0
    %1369 = vmatpush1.msra.mxu0 0.0
    %1370 = vmatprep.subr.mxu0 0.0
    %1371 = vmatpush1.msra.mxu0 0.0
    %1372 = vmatprep.subr.mxu0 0.0
    %1373 = vmatpush1.msra.mxu0 0.0
    %1374 = vmatprep.subr.mxu0 0.0
    %1375 = vmatpush1.msra.mxu0 0.0
    %1376 = vmatprep.subr.mxu0 0.0
    %1377 = vmatpush1.msra.mxu0 0.0
    %1378 = vmatprep.subr.mxu0 0.0
    %1379 = vmatpush1.msra.mxu0 0.0
    %1380 = vmatprep.subr.mxu0 0.0
    %1381 = vmatpush1.msra.mxu0 0.0
    %1382 = vmatprep.subr.mxu0 0.0
    %1383 = vmatpush1.msra.mxu0 0.0
    %1384 = vmatprep.subr.mxu0 0.0
    %1385 = vmatpush1.msra.mxu0 0.0
    %1386 = vmatprep.subr.mxu0 0.0
    %1387 = vmatpush1.msra.mxu0 0.0
    %1388 = vmatprep.subr.mxu0 0.0
    %1389 = vmatpush1.msra.mxu0 0.0
    %1390 = vmatprep.mubr.f32.mxu0 0.0
    %v1391 = vand.u32 %v732, 4294901760
    %1392 = vmatmul.mubr.f32.gmra.mrb[0].mxu0 %v1391
    %v1393 = vpop.f32.mrb[0].mxu0
    %v1394 = vadd.f32 %v1307, %v1393
    %v1395 = vpop.f32.mrb[0].mxu0
    %1396 = vdwg.mxu0
    %v1397 = vmax.f32 %v1394, 0.0
    %v1398 = vld [vmem:[#allocation6] sm:$0xff]
    %v1399 = vld [vmem:[#allocation6 + $0x8] sm:$0xff]
    %v1400 = vld [vmem:[#allocation6 + $0x10] sm:$0xff]
    %v1401 = vld [vmem:[#allocation6 + $0x18] sm:$0xff]
    %v1402 = vld [vmem:[#allocation6 + $0x20] sm:$0xff]
    %v1403 = vld [vmem:[#allocation6 + $0x28] sm:$0xff]
    %v1404 = vld [vmem:[#allocation6 + $0x30] sm:$0xff]
    %v1405 = vld [vmem:[#allocation6 + $0x38] sm:$0xff]
    %v1406 = vld [vmem:[#allocation6 + $0x40] sm:$0xff]
    %v1407 = vld [vmem:[#allocation6 + $0x48] sm:$0xff]
    %v1408 = vld [vmem:[#allocation6 + $0x50] sm:$0xff]
    %v1409 = vld [vmem:[#allocation6 + $0x58] sm:$0xff]
    %v1410 = vld [vmem:[#allocation6 + $0x60] sm:$0xff]
    %v1411 = vld [vmem:[#allocation6 + $0x68] sm:$0xff]
    %v1412 = vld [vmem:[#allocation6 + $0x70] sm:$0xff]
    %v1413 = vld [vmem:[#allocation6 + $0x78] sm:$0xff]
    %v1414 = vld [vmem:[%s6] sm:$0x1]
    %v1416 = vlaneseq
    %v1417 = vshrl.u32 %v1416, 7
    %v1418 = vsub.s32 0, %v1417
    %v1419 = vrot.slane %v1414, %v1418
    %1421 = vmatprep.subr.mxu0 0.0
    %v1422 = vand.u32 %v1398, 4294901760
    %1423 = vmatpush1.msra.mxu0 %v1422
    %1424 = vmatprep.subr.mxu0 0.0
    %v1425 = vand.u32 %v1399, 4294901760
    %1426 = vmatpush1.msra.mxu0 %v1425
    %1427 = vmatprep.subr.mxu0 0.0
    %v1428 = vand.u32 %v1400, 4294901760
    %1429 = vmatpush1.msra.mxu0 %v1428
    %1430 = vmatprep.subr.mxu0 0.0
    %v1431 = vand.u32 %v1401, 4294901760
    %1432 = vmatpush1.msra.mxu0 %v1431
    %1433 = vmatprep.subr.mxu0 0.0
    %v1434 = vand.u32 %v1402, 4294901760
    %1435 = vmatpush1.msra.mxu0 %v1434
    %1436 = vmatprep.subr.mxu0 0.0
    %v1437 = vand.u32 %v1403, 4294901760
    %1438 = vmatpush1.msra.mxu0 %v1437
    %1439 = vmatprep.subr.mxu0 0.0
    %v1440 = vand.u32 %v1404, 4294901760
    %1441 = vmatpush1.msra.mxu0 %v1440
    %1442 = vmatprep.subr.mxu0 0.0
    %v1443 = vand.u32 %v1405, 4294901760
    %1444 = vmatpush1.msra.mxu0 %v1443
    %1445 = vmatprep.subr.mxu0 0.0
    %v1446 = vand.u32 %v1406, 4294901760
    %1447 = vmatpush1.msra.mxu0 %v1446
    %1448 = vmatprep.subr.mxu0 0.0
    %v1449 = vand.u32 %v1407, 4294901760
    %1450 = vmatpush1.msra.mxu0 %v1449
    %1451 = vmatprep.subr.mxu0 0.0
    %v1452 = vand.u32 %v1408, 4294901760
    %1453 = vmatpush1.msra.mxu0 %v1452
    %1454 = vmatprep.subr.mxu0 0.0
    %v1455 = vand.u32 %v1409, 4294901760
    %1456 = vmatpush1.msra.mxu0 %v1455
    %1457 = vmatprep.subr.mxu0 0.0
    %v1458 = vand.u32 %v1410, 4294901760
    %1459 = vmatpush1.msra.mxu0 %v1458
    %1460 = vmatprep.subr.mxu0 0.0
    %v1461 = vand.u32 %v1411, 4294901760
    %1462 = vmatpush1.msra.mxu0 %v1461
    %1463 = vmatprep.subr.mxu0 0.0
    %v1464 = vand.u32 %v1412, 4294901760
    %1465 = vmatpush1.msra.mxu0 %v1464
    %1466 = vmatprep.subr.mxu0 0.0
    %v1467 = vand.u32 %v1413, 4294901760
    %1468 = vmatpush1.msra.mxu0 %v1467
    %1469 = vmatprep.subr.mxu0 0.0
    %1470 = vmatpush1.msra.mxu0 0.0
    %1471 = vmatprep.subr.mxu0 0.0
    %1472 = vmatpush1.msra.mxu0 0.0
    %1473 = vmatprep.subr.mxu0 0.0
    %1474 = vmatpush1.msra.mxu0 0.0
    %1475 = vmatprep.subr.mxu0 0.0
    %1476 = vmatpush1.msra.mxu0 0.0
    %1477 = vmatprep.subr.mxu0 0.0
    %1478 = vmatpush1.msra.mxu0 0.0
    %1479 = vmatprep.subr.mxu0 0.0
    %1480 = vmatpush1.msra.mxu0 0.0
    %1481 = vmatprep.subr.mxu0 0.0
    %1482 = vmatpush1.msra.mxu0 0.0
    %1483 = vmatprep.subr.mxu0 0.0
    %1484 = vmatpush1.msra.mxu0 0.0
    %1485 = vmatprep.subr.mxu0 0.0
    %1486 = vmatpush1.msra.mxu0 0.0
    %1487 = vmatprep.subr.mxu0 0.0
    %1488 = vmatpush1.msra.mxu0 0.0
    %1489 = vmatprep.subr.mxu0 0.0
    %1490 = vmatpush1.msra.mxu0 0.0
    %1491 = vmatprep.subr.mxu0 0.0
    %1492 = vmatpush1.msra.mxu0 0.0
    %1493 = vmatprep.subr.mxu0 0.0
    %1494 = vmatpush1.msra.mxu0 0.0
    %1495 = vmatprep.subr.mxu0 0.0
    %1496 = vmatpush1.msra.mxu0 0.0
    %1497 = vmatprep.subr.mxu0 0.0
    %1498 = vmatpush1.msra.mxu0 0.0
    %1499 = vmatprep.subr.mxu0 0.0
    %1500 = vmatpush1.msra.mxu0 0.0
    %1501 = vmatprep.mubr.f32.mxu0 0.0
    %v1502 = vand.u32 %v1397, 4294901760
    %v1503 = vsub.f32 %v1397, %v1502
    %v1504 = vand.u32 %v1503, 4294901760
    %v1505 = vsub.f32 %v1503, %v1504
    %v1506 = vand.u32 %v1505, 4294901760
    %1507 = vmatmul.mubr.f32.gmra.mrb[0].mxu0 %v1506
    %v1508 = vpop.f32.mrb[0].mxu0
    %v1509 = vadd.f32 %v1419, %v1508
    %v1510 = vpop.f32.mrb[0].mxu0
    %1511 = vdwg.mxu0
    %1512 = vmatprep.subr.mxu0 0.0
    %v1513 = vand.u32 %v1398, 4294901760
    %v1514 = vsub.f32 %v1398, %v1513
    %v1515 = vand.u32 %v1514, 4294901760
    %v1516 = vsub.f32 %v1514, %v1515
    %v1517 = vand.u32 %v1516, 4294901760
    %1518 = vmatpush1.msra.mxu0 %v1517
    %1519 = vmatprep.subr.mxu0 0.0
    %v1520 = vand.u32 %v1399, 4294901760
    %v1521 = vsub.f32 %v1399, %v1520
    %v1522 = vand.u32 %v1521, 4294901760
    %v1523 = vsub.f32 %v1521, %v1522
    %v1524 = vand.u32 %v1523, 4294901760
    %1525 = vmatpush1.msra.mxu0 %v1524
    %1526 = vmatprep.subr.mxu0 0.0
    %v1527 = vand.u32 %v1400, 4294901760
    %v1528 = vsub.f32 %v1400, %v1527
    %v1529 = vand.u32 %v1528, 4294901760
    %v1530 = vsub.f32 %v1528, %v1529
    %v1531 = vand.u32 %v1530, 4294901760
    %1532 = vmatpush1.msra.mxu0 %v1531
    %1533 = vmatprep.subr.mxu0 0.0
    %v1534 = vand.u32 %v1401, 4294901760
    %v1535 = vsub.f32 %v1401, %v1534
    %v1536 = vand.u32 %v1535, 4294901760
    %v1537 = vsub.f32 %v1535, %v1536
    %v1538 = vand.u32 %v1537, 4294901760
    %1539 = vmatpush1.msra.mxu0 %v1538
    %1540 = vmatprep.subr.mxu0 0.0
    %v1541 = vand.u32 %v1402, 4294901760
    %v1542 = vsub.f32 %v1402, %v1541
    %v1543 = vand.u32 %v1542, 4294901760
    %v1544 = vsub.f32 %v1542, %v1543
    %v1545 = vand.u32 %v1544, 4294901760
    %1546 = vmatpush1.msra.mxu0 %v1545
    %1547 = vmatprep.subr.mxu0 0.0
    %v1548 = vand.u32 %v1403, 4294901760
    %v1549 = vsub.f32 %v1403, %v1548
    %v1550 = vand.u32 %v1549, 4294901760
    %v1551 = vsub.f32 %v1549, %v1550
    %v1552 = vand.u32 %v1551, 4294901760
    %1553 = vmatpush1.msra.mxu0 %v1552
    %1554 = vmatprep.subr.mxu0 0.0
    %v1555 = vand.u32 %v1404, 4294901760
    %v1556 = vsub.f32 %v1404, %v1555
    %v1557 = vand.u32 %v1556, 4294901760
    %v1558 = vsub.f32 %v1556, %v1557
    %v1559 = vand.u32 %v1558, 4294901760
    %1560 = vmatpush1.msra.mxu0 %v1559
    %1561 = vmatprep.subr.mxu0 0.0
    %v1562 = vand.u32 %v1405, 4294901760
    %v1563 = vsub.f32 %v1405, %v1562
    %v1564 = vand.u32 %v1563, 4294901760
    %v1565 = vsub.f32 %v1563, %v1564
    %v1566 = vand.u32 %v1565, 4294901760
    %1567 = vmatpush1.msra.mxu0 %v1566
    %1568 = vmatprep.subr.mxu0 0.0
    %v1569 = vand.u32 %v1406, 4294901760
    %v1570 = vsub.f32 %v1406, %v1569
    %v1571 = vand.u32 %v1570, 4294901760
    %v1572 = vsub.f32 %v1570, %v1571
    %v1573 = vand.u32 %v1572, 4294901760
    %1574 = vmatpush1.msra.mxu0 %v1573
    %1575 = vmatprep.subr.mxu0 0.0
    %v1576 = vand.u32 %v1407, 4294901760
    %v1577 = vsub.f32 %v1407, %v1576
    %v1578 = vand.u32 %v1577, 4294901760
    %v1579 = vsub.f32 %v1577, %v1578
    %v1580 = vand.u32 %v1579, 4294901760
    %1581 = vmatpush1.msra.mxu0 %v1580
    %1582 = vmatprep.subr.mxu0 0.0
    %v1583 = vand.u32 %v1408, 4294901760
    %v1584 = vsub.f32 %v1408, %v1583
    %v1585 = vand.u32 %v1584, 4294901760
    %v1586 = vsub.f32 %v1584, %v1585
    %v1587 = vand.u32 %v1586, 4294901760
    %1588 = vmatpush1.msra.mxu0 %v1587
    %1589 = vmatprep.subr.mxu0 0.0
    %v1590 = vand.u32 %v1409, 4294901760
    %v1591 = vsub.f32 %v1409, %v1590
    %v1592 = vand.u32 %v1591, 4294901760
    %v1593 = vsub.f32 %v1591, %v1592
    %v1594 = vand.u32 %v1593, 4294901760
    %1595 = vmatpush1.msra.mxu0 %v1594
    %1596 = vmatprep.subr.mxu0 0.0
    %v1597 = vand.u32 %v1410, 4294901760
    %v1598 = vsub.f32 %v1410, %v1597
    %v1599 = vand.u32 %v1598, 4294901760
    %v1600 = vsub.f32 %v1598, %v1599
    %v1601 = vand.u32 %v1600, 4294901760
    %1602 = vmatpush1.msra.mxu0 %v1601
    %1603 = vmatprep.subr.mxu0 0.0
    %v1604 = vand.u32 %v1411, 4294901760
    %v1605 = vsub.f32 %v1411, %v1604
    %v1606 = vand.u32 %v1605, 4294901760
    %v1607 = vsub.f32 %v1605, %v1606
    %v1608 = vand.u32 %v1607, 4294901760
    %1609 = vmatpush1.msra.mxu0 %v1608
    %1610 = vmatprep.subr.mxu0 0.0
    %v1611 = vand.u32 %v1412, 4294901760
    %v1612 = vsub.f32 %v1412, %v1611
    %v1613 = vand.u32 %v1612, 4294901760
    %v1614 = vsub.f32 %v1612, %v1613
    %v1615 = vand.u32 %v1614, 4294901760
    %1616 = vmatpush1.msra.mxu0 %v1615
    %1617 = vmatprep.subr.mxu0 0.0
    %v1618 = vand.u32 %v1413, 4294901760
    %v1619 = vsub.f32 %v1413, %v1618
    %v1620 = vand.u32 %v1619, 4294901760
    %v1621 = vsub.f32 %v1619, %v1620
    %v1622 = vand.u32 %v1621, 4294901760
    %1623 = vmatpush1.msra.mxu0 %v1622
    %1624 = vmatprep.subr.mxu0 0.0
    %1625 = vmatpush1.msra.mxu0 0.0
    %1626 = vmatprep.subr.mxu0 0.0
    %1627 = vmatpush1.msra.mxu0 0.0
    %1628 = vmatprep.subr.mxu0 0.0
    %1629 = vmatpush1.msra.mxu0 0.0
    %1630 = vmatprep.subr.mxu0 0.0
    %1631 = vmatpush1.msra.mxu0 0.0
    %1632 = vmatprep.subr.mxu0 0.0
    %1633 = vmatpush1.msra.mxu0 0.0
    %1634 = vmatprep.subr.mxu0 0.0
    %1635 = vmatpush1.msra.mxu0 0.0
    %1636 = vmatprep.subr.mxu0 0.0
    %1637 = vmatpush1.msra.mxu0 0.0
    %1638 = vmatprep.subr.mxu0 0.0
    %1639 = vmatpush1.msra.mxu0 0.0
    %1640 = vmatprep.subr.mxu0 0.0
    %1641 = vmatpush1.msra.mxu0 0.0
    %1642 = vmatprep.subr.mxu0 0.0
    %1643 = vmatpush1.msra.mxu0 0.0
    %1644 = vmatprep.subr.mxu0 0.0
    %1645 = vmatpush1.msra.mxu0 0.0
    %1646 = vmatprep.subr.mxu0 0.0
    %1647 = vmatpush1.msra.mxu0 0.0
    %1648 = vmatprep.subr.mxu0 0.0
    %1649 = vmatpush1.msra.mxu0 0.0
    %1650 = vmatprep.subr.mxu0 0.0
    %1651 = vmatpush1.msra.mxu0 0.0
    %1652 = vmatprep.subr.mxu0 0.0
    %1653 = vmatpush1.msra.mxu0 0.0
    %1654 = vmatprep.subr.mxu0 0.0
    %1655 = vmatpush1.msra.mxu0 0.0
    %1656 = vmatprep.mubr.f32.mxu0 0.0
    %v1657 = vand.u32 %v1397, 4294901760
    %1658 = vmatmul.mubr.f32.gmra.mrb[0].mxu0 %v1657
    %v1659 = vpop.f32.mrb[0].mxu0
    %v1660 = vadd.f32 %v1509, %v1659
    %v1661 = vpop.f32.mrb[0].mxu0
    %1662 = vdwg.mxu0
    %1663 = vmatprep.subr.mxu0 0.0
    %v1664 = vand.u32 %v1398, 4294901760
    %v1665 = vsub.f32 %v1398, %v1664
    %1666 = vmatpush1.msra.mxu0 %v1665
    %1667 = vmatprep.subr.mxu0 0.0
    %v1668 = vand.u32 %v1399, 4294901760
    %v1669 = vsub.f32 %v1399, %v1668
    %1670 = vmatpush1.msra.mxu0 %v1669
    %1671 = vmatprep.subr.mxu0 0.0
    %v1672 = vand.u32 %v1400, 4294901760
    %v1673 = vsub.f32 %v1400, %v1672
    %1674 = vmatpush1.msra.mxu0 %v1673
    %1675 = vmatprep.subr.mxu0 0.0
    %v1676 = vand.u32 %v1401, 4294901760
    %v1677 = vsub.f32 %v1401, %v1676
    %1678 = vmatpush1.msra.mxu0 %v1677
    %1679 = vmatprep.subr.mxu0 0.0
    %v1680 = vand.u32 %v1402, 4294901760
    %v1681 = vsub.f32 %v1402, %v1680
    %1682 = vmatpush1.msra.mxu0 %v1681
    %1683 = vmatprep.subr.mxu0 0.0
    %v1684 = vand.u32 %v1403, 4294901760
    %v1685 = vsub.f32 %v1403, %v1684
    %1686 = vmatpush1.msra.mxu0 %v1685
    %1687 = vmatprep.subr.mxu0 0.0
    %v1688 = vand.u32 %v1404, 4294901760
    %v1689 = vsub.f32 %v1404, %v1688
    %1690 = vmatpush1.msra.mxu0 %v1689
    %1691 = vmatprep.subr.mxu0 0.0
    %v1692 = vand.u32 %v1405, 4294901760
    %v1693 = vsub.f32 %v1405, %v1692
    %1694 = vmatpush1.msra.mxu0 %v1693
    %1695 = vmatprep.subr.mxu0 0.0
    %v1696 = vand.u32 %v1406, 4294901760
    %v1697 = vsub.f32 %v1406, %v1696
    %1698 = vmatpush1.msra.mxu0 %v1697
    %1699 = vmatprep.subr.mxu0 0.0
    %v1700 = vand.u32 %v1407, 4294901760
    %v1701 = vsub.f32 %v1407, %v1700
    %1702 = vmatpush1.msra.mxu0 %v1701
    %1703 = vmatprep.subr.mxu0 0.0
    %v1704 = vand.u32 %v1408, 4294901760
    %v1705 = vsub.f32 %v1408, %v1704
    %1706 = vmatpush1.msra.mxu0 %v1705
    %1707 = vmatprep.subr.mxu0 0.0
    %v1708 = vand.u32 %v1409, 4294901760
    %v1709 = vsub.f32 %v1409, %v1708
    %1710 = vmatpush1.msra.mxu0 %v1709
    %1711 = vmatprep.subr.mxu0 0.0
    %v1712 = vand.u32 %v1410, 4294901760
    %v1713 = vsub.f32 %v1410, %v1712
    %1714 = vmatpush1.msra.mxu0 %v1713
    %1715 = vmatprep.subr.mxu0 0.0
    %v1716 = vand.u32 %v1411, 4294901760
    %v1717 = vsub.f32 %v1411, %v1716
    %1718 = vmatpush1.msra.mxu0 %v1717
    %1719 = vmatprep.subr.mxu0 0.0
    %v1720 = vand.u32 %v1412, 4294901760
    %v1721 = vsub.f32 %v1412, %v1720
    %1722 = vmatpush1.msra.mxu0 %v1721
    %1723 = vmatprep.subr.mxu0 0.0
    %v1724 = vand.u32 %v1413, 4294901760
    %v1725 = vsub.f32 %v1413, %v1724
    %1726 = vmatpush1.msra.mxu0 %v1725
    %1727 = vmatprep.subr.mxu0 0.0
    %1728 = vmatpush1.msra.mxu0 0.0
    %1729 = vmatprep.subr.mxu0 0.0
    %1730 = vmatpush1.msra.mxu0 0.0
    %1731 = vmatprep.subr.mxu0 0.0
    %1732 = vmatpush1.msra.mxu0 0.0
    %1733 = vmatprep.subr.mxu0 0.0
    %1734 = vmatpush1.msra.mxu0 0.0
    %1735 = vmatprep.subr.mxu0 0.0
    %1736 = vmatpush1.msra.mxu0 0.0
    %1737 = vmatprep.subr.mxu0 0.0
    %1738 = vmatpush1.msra.mxu0 0.0
    %1739 = vmatprep.subr.mxu0 0.0
    %1740 = vmatpush1.msra.mxu0 0.0
    %1741 = vmatprep.subr.mxu0 0.0
    %1742 = vmatpush1.msra.mxu0 0.0
    %1743 = vmatprep.subr.mxu0 0.0
    %1744 = vmatpush1.msra.mxu0 0.0
    %1745 = vmatprep.subr.mxu0 0.0
    %1746 = vmatpush1.msra.mxu0 0.0
    %1747 = vmatprep.subr.mxu0 0.0
    %1748 = vmatpush1.msra.mxu0 0.0
    %1749 = vmatprep.subr.mxu0 0.0
    %1750 = vmatpush1.msra.mxu0 0.0
    %1751 = vmatprep.subr.mxu0 0.0
    %1752 = vmatpush1.msra.mxu0 0.0
    %1753 = vmatprep.subr.mxu0 0.0
    %1754 = vmatpush1.msra.mxu0 0.0
    %1755 = vmatprep.subr.mxu0 0.0
    %1756 = vmatpush1.msra.mxu0 0.0
    %1757 = vmatprep.subr.mxu0 0.0
    %1758 = vmatpush1.msra.mxu0 0.0
    %1759 = vmatprep.mubr.f32.mxu0 0.0
    %v1760 = vand.u32 %v1397, 4294901760
    %v1761 = vsub.f32 %v1397, %v1760
    %1762 = vmatmul.mubr.f32.gmra.mrb[0].mxu0 %v1761
    %v1763 = vpop.f32.mrb[0].mxu0
    %v1764 = vadd.f32 %v1660, %v1763
    %v1765 = vpop.f32.mrb[0].mxu0
    %1766 = vdwg.mxu0
    %1767 = vmatprep.subr.mxu0 0.0
    %v1768 = vand.u32 %v1398, 4294901760
    %1769 = vmatpush1.msra.mxu0 %v1768
    %1770 = vmatprep.subr.mxu0 0.0
    %v1771 = vand.u32 %v1399, 4294901760
    %1772 = vmatpush1.msra.mxu0 %v1771
    %1773 = vmatprep.subr.mxu0 0.0
    %v1774 = vand.u32 %v1400, 4294901760
    %1775 = vmatpush1.msra.mxu0 %v1774
    %1776 = vmatprep.subr.mxu0 0.0
    %v1777 = vand.u32 %v1401, 4294901760
    %1778 = vmatpush1.msra.mxu0 %v1777
    %1779 = vmatprep.subr.mxu0 0.0
    %v1780 = vand.u32 %v1402, 4294901760
    %1781 = vmatpush1.msra.mxu0 %v1780
    %1782 = vmatprep.subr.mxu0 0.0
    %v1783 = vand.u32 %v1403, 4294901760
    %1784 = vmatpush1.msra.mxu0 %v1783
    %1785 = vmatprep.subr.mxu0 0.0
    %v1786 = vand.u32 %v1404, 4294901760
    %1787 = vmatpush1.msra.mxu0 %v1786
    %1788 = vmatprep.subr.mxu0 0.0
    %v1789 = vand.u32 %v1405, 4294901760
    %1790 = vmatpush1.msra.mxu0 %v1789
    %1791 = vmatprep.subr.mxu0 0.0
    %v1792 = vand.u32 %v1406, 4294901760
    %1793 = vmatpush1.msra.mxu0 %v1792
    %1794 = vmatprep.subr.mxu0 0.0
    %v1795 = vand.u32 %v1407, 4294901760
    %1796 = vmatpush1.msra.mxu0 %v1795
    %1797 = vmatprep.subr.mxu0 0.0
    %v1798 = vand.u32 %v1408, 4294901760
    %1799 = vmatpush1.msra.mxu0 %v1798
    %1800 = vmatprep.subr.mxu0 0.0
    %v1801 = vand.u32 %v1409, 4294901760
    %1802 = vmatpush1.msra.mxu0 %v1801
    %1803 = vmatprep.subr.mxu0 0.0
    %v1804 = vand.u32 %v1410, 4294901760
    %1805 = vmatpush1.msra.mxu0 %v1804
    %1806 = vmatprep.subr.mxu0 0.0
    %v1807 = vand.u32 %v1411, 4294901760
    %1808 = vmatpush1.msra.mxu0 %v1807
    %1809 = vmatprep.subr.mxu0 0.0
    %v1810 = vand.u32 %v1412, 4294901760
    %1811 = vmatpush1.msra.mxu0 %v1810
    %1812 = vmatprep.subr.mxu0 0.0
    %v1813 = vand.u32 %v1413, 4294901760
    %1814 = vmatpush1.msra.mxu0 %v1813
    %1815 = vmatprep.subr.mxu0 0.0
    %1816 = vmatpush1.msra.mxu0 0.0
    %1817 = vmatprep.subr.mxu0 0.0
    %1818 = vmatpush1.msra.mxu0 0.0
    %1819 = vmatprep.subr.mxu0 0.0
    %1820 = vmatpush1.msra.mxu0 0.0
    %1821 = vmatprep.subr.mxu0 0.0
    %1822 = vmatpush1.msra.mxu0 0.0
    %1823 = vmatprep.subr.mxu0 0.0
    %1824 = vmatpush1.msra.mxu0 0.0
    %1825 = vmatprep.subr.mxu0 0.0
    %1826 = vmatpush1.msra.mxu0 0.0
    %1827 = vmatprep.subr.mxu0 0.0
    %1828 = vmatpush1.msra.mxu0 0.0
    %1829 = vmatprep.subr.mxu0 0.0
    %1830 = vmatpush1.msra.mxu0 0.0
    %1831 = vmatprep.subr.mxu0 0.0
    %1832 = vmatpush1.msra.mxu0 0.0
    %1833 = vmatprep.subr.mxu0 0.0
    %1834 = vmatpush1.msra.mxu0 0.0
    %1835 = vmatprep.subr.mxu0 0.0
    %1836 = vmatpush1.msra.mxu0 0.0
    %1837 = vmatprep.subr.mxu0 0.0
    %1838 = vmatpush1.msra.mxu0 0.0
    %1839 = vmatprep.subr.mxu0 0.0
    %1840 = vmatpush1.msra.mxu0 0.0
    %1841 = vmatprep.subr.mxu0 0.0
    %1842 = vmatpush1.msra.mxu0 0.0
    %1843 = vmatprep.subr.mxu0 0.0
    %1844 = vmatpush1.msra.mxu0 0.0
    %1845 = vmatprep.subr.mxu0 0.0
    %1846 = vmatpush1.msra.mxu0 0.0
    %1847 = vmatprep.mubr.f32.mxu0 0.0
    %v1848 = vand.u32 %v1397, 4294901760
    %v1849 = vsub.f32 %v1397, %v1848
    %v1850 = vand.u32 %v1849, 4294901760
    %1851 = vmatmul.mubr.f32.gmra.mrb[0].mxu0 %v1850
    %v1852 = vpop.f32.mrb[0].mxu0
    %v1853 = vadd.f32 %v1764, %v1852
    %v1854 = vpop.f32.mrb[0].mxu0
    %1855 = vdwg.mxu0
    %1856 = vmatprep.subr.mxu0 0.0
    %v1857 = vand.u32 %v1398, 4294901760
    %v1858 = vsub.f32 %v1398, %v1857
    %v1859 = vand.u32 %v1858, 4294901760
    %1860 = vmatpush1.msra.mxu0 %v1859
    %1861 = vmatprep.subr.mxu0 0.0
    %v1862 = vand.u32 %v1399, 4294901760
    %v1863 = vsub.f32 %v1399, %v1862
    %v1864 = vand.u32 %v1863, 4294901760
    %1865 = vmatpush1.msra.mxu0 %v1864
    %1866 = vmatprep.subr.mxu0 0.0
    %v1867 = vand.u32 %v1400, 4294901760
    %v1868 = vsub.f32 %v1400, %v1867
    %v1869 = vand.u32 %v1868, 4294901760
    %1870 = vmatpush1.msra.mxu0 %v1869
    %1871 = vmatprep.subr.mxu0 0.0
    %v1872 = vand.u32 %v1401, 4294901760
    %v1873 = vsub.f32 %v1401, %v1872
    %v1874 = vand.u32 %v1873, 4294901760
    %1875 = vmatpush1.msra.mxu0 %v1874
    %1876 = vmatprep.subr.mxu0 0.0
    %v1877 = vand.u32 %v1402, 4294901760
    %v1878 = vsub.f32 %v1402, %v1877
    %v1879 = vand.u32 %v1878, 4294901760
    %1880 = vmatpush1.msra.mxu0 %v1879
    %1881 = vmatprep.subr.mxu0 0.0
    %v1882 = vand.u32 %v1403, 4294901760
    %v1883 = vsub.f32 %v1403, %v1882
    %v1884 = vand.u32 %v1883, 4294901760
    %1885 = vmatpush1.msra.mxu0 %v1884
    %1886 = vmatprep.subr.mxu0 0.0
    %v1887 = vand.u32 %v1404, 4294901760
    %v1888 = vsub.f32 %v1404, %v1887
    %v1889 = vand.u32 %v1888, 4294901760
    %1890 = vmatpush1.msra.mxu0 %v1889
    %1891 = vmatprep.subr.mxu0 0.0
    %v1892 = vand.u32 %v1405, 4294901760
    %v1893 = vsub.f32 %v1405, %v1892
    %v1894 = vand.u32 %v1893, 4294901760
    %1895 = vmatpush1.msra.mxu0 %v1894
    %1896 = vmatprep.subr.mxu0 0.0
    %v1897 = vand.u32 %v1406, 4294901760
    %v1898 = vsub.f32 %v1406, %v1897
    %v1899 = vand.u32 %v1898, 4294901760
    %1900 = vmatpush1.msra.mxu0 %v1899
    %1901 = vmatprep.subr.mxu0 0.0
    %v1902 = vand.u32 %v1407, 4294901760
    %v1903 = vsub.f32 %v1407, %v1902
    %v1904 = vand.u32 %v1903, 4294901760
    %1905 = vmatpush1.msra.mxu0 %v1904
    %1906 = vmatprep.subr.mxu0 0.0
    %v1907 = vand.u32 %v1408, 4294901760
    %v1908 = vsub.f32 %v1408, %v1907
    %v1909 = vand.u32 %v1908, 4294901760
    %1910 = vmatpush1.msra.mxu0 %v1909
    %1911 = vmatprep.subr.mxu0 0.0
    %v1912 = vand.u32 %v1409, 4294901760
    %v1913 = vsub.f32 %v1409, %v1912
    %v1914 = vand.u32 %v1913, 4294901760
    %1915 = vmatpush1.msra.mxu0 %v1914
    %1916 = vmatprep.subr.mxu0 0.0
    %v1917 = vand.u32 %v1410, 4294901760
    %v1918 = vsub.f32 %v1410, %v1917
    %v1919 = vand.u32 %v1918, 4294901760
    %1920 = vmatpush1.msra.mxu0 %v1919
    %1921 = vmatprep.subr.mxu0 0.0
    %v1922 = vand.u32 %v1411, 4294901760
    %v1923 = vsub.f32 %v1411, %v1922
    %v1924 = vand.u32 %v1923, 4294901760
    %1925 = vmatpush1.msra.mxu0 %v1924
    %1926 = vmatprep.subr.mxu0 0.0
    %v1927 = vand.u32 %v1412, 4294901760
    %v1928 = vsub.f32 %v1412, %v1927
    %v1929 = vand.u32 %v1928, 4294901760
    %1930 = vmatpush1.msra.mxu0 %v1929
    %1931 = vmatprep.subr.mxu0 0.0
    %v1932 = vand.u32 %v1413, 4294901760
    %v1933 = vsub.f32 %v1413, %v1932
    %v1934 = vand.u32 %v1933, 4294901760
    %1935 = vmatpush1.msra.mxu0 %v1934
    %1936 = vmatprep.subr.mxu0 0.0
    %1937 = vmatpush1.msra.mxu0 0.0
    %1938 = vmatprep.subr.mxu0 0.0
    %1939 = vmatpush1.msra.mxu0 0.0
    %1940 = vmatprep.subr.mxu0 0.0
    %1941 = vmatpush1.msra.mxu0 0.0
    %1942 = vmatprep.subr.mxu0 0.0
    %1943 = vmatpush1.msra.mxu0 0.0
    %1944 = vmatprep.subr.mxu0 0.0
    %1945 = vmatpush1.msra.mxu0 0.0
    %1946 = vmatprep.subr.mxu0 0.0
    %1947 = vmatpush1.msra.mxu0 0.0
    %1948 = vmatprep.subr.mxu0 0.0
    %1949 = vmatpush1.msra.mxu0 0.0
    %1950 = vmatprep.subr.mxu0 0.0
    %1951 = vmatpush1.msra.mxu0 0.0
    %1952 = vmatprep.subr.mxu0 0.0
    %1953 = vmatpush1.msra.mxu0 0.0
    %1954 = vmatprep.subr.mxu0 0.0
    %1955 = vmatpush1.msra.mxu0 0.0
    %1956 = vmatprep.subr.mxu0 0.0
    %1957 = vmatpush1.msra.mxu0 0.0
    %1958 = vmatprep.subr.mxu0 0.0
    %1959 = vmatpush1.msra.mxu0 0.0
    %1960 = vmatprep.subr.mxu0 0.0
    %1961 = vmatpush1.msra.mxu0 0.0
    %1962 = vmatprep.subr.mxu0 0.0
    %1963 = vmatpush1.msra.mxu0 0.0
    %1964 = vmatprep.subr.mxu0 0.0
    %1965 = vmatpush1.msra.mxu0 0.0
    %1966 = vmatprep.subr.mxu0 0.0
    %1967 = vmatpush1.msra.mxu0 0.0
    %1968 = vmatprep.mubr.f32.mxu0 0.0
    %v1969 = vand.u32 %v1397, 4294901760
    %1970 = vmatmul.mubr.f32.gmra.mrb[0].mxu0 %v1969
    %v1971 = vpop.f32.mrb[0].mxu0
    %v1972 = vadd.f32 %v1853, %v1971
    %v1973 = vpop.f32.mrb[0].mxu0
    %1974 = vdwg.mxu0
    %1975 = vmatprep.subr.mxu0 0.0
    %v1976 = vand.u32 %v1398, 4294901760
    %1977 = vmatpush1.msra.mxu0 %v1976
    %1978 = vmatprep.subr.mxu0 0.0
    %v1979 = vand.u32 %v1399, 4294901760
    %1980 = vmatpush1.msra.mxu0 %v1979
    %1981 = vmatprep.subr.mxu0 0.0
    %v1982 = vand.u32 %v1400, 4294901760
    %1983 = vmatpush1.msra.mxu0 %v1982
    %1984 = vmatprep.subr.mxu0 0.0
    %v1985 = vand.u32 %v1401, 4294901760
    %1986 = vmatpush1.msra.mxu0 %v1985
    %1987 = vmatprep.subr.mxu0 0.0
    %v1988 = vand.u32 %v1402, 4294901760
    %1989 = vmatpush1.msra.mxu0 %v1988
    %1990 = vmatprep.subr.mxu0 0.0
    %v1991 = vand.u32 %v1403, 4294901760
    %1992 = vmatpush1.msra.mxu0 %v1991
    %1993 = vmatprep.subr.mxu0 0.0
    %v1994 = vand.u32 %v1404, 4294901760
    %1995 = vmatpush1.msra.mxu0 %v1994
    %1996 = vmatprep.subr.mxu0 0.0
    %v1997 = vand.u32 %v1405, 4294901760
    %1998 = vmatpush1.msra.mxu0 %v1997
    %1999 = vmatprep.subr.mxu0 0.0
    %v2000 = vand.u32 %v1406, 4294901760
    %2001 = vmatpush1.msra.mxu0 %v2000
    %2002 = vmatprep.subr.mxu0 0.0
    %v2003 = vand.u32 %v1407, 4294901760
    %2004 = vmatpush1.msra.mxu0 %v2003
    %2005 = vmatprep.subr.mxu0 0.0
    %v2006 = vand.u32 %v1408, 4294901760
    %2007 = vmatpush1.msra.mxu0 %v2006
    %2008 = vmatprep.subr.mxu0 0.0
    %v2009 = vand.u32 %v1409, 4294901760
    %2010 = vmatpush1.msra.mxu0 %v2009
    %2011 = vmatprep.subr.mxu0 0.0
    %v2012 = vand.u32 %v1410, 4294901760
    %2013 = vmatpush1.msra.mxu0 %v2012
    %2014 = vmatprep.subr.mxu0 0.0
    %v2015 = vand.u32 %v1411, 4294901760
    %2016 = vmatpush1.msra.mxu0 %v2015
    %2017 = vmatprep.subr.mxu0 0.0
    %v2018 = vand.u32 %v1412, 4294901760
    %2019 = vmatpush1.msra.mxu0 %v2018
    %2020 = vmatprep.subr.mxu0 0.0
    %v2021 = vand.u32 %v1413, 4294901760
    %2022 = vmatpush1.msra.mxu0 %v2021
    %2023 = vmatprep.subr.mxu0 0.0
    %2024 = vmatpush1.msra.mxu0 0.0
    %2025 = vmatprep.subr.mxu0 0.0
    %2026 = vmatpush1.msra.mxu0 0.0
    %2027 = vmatprep.subr.mxu0 0.0
    %2028 = vmatpush1.msra.mxu0 0.0
    %2029 = vmatprep.subr.mxu0 0.0
    %2030 = vmatpush1.msra.mxu0 0.0
    %2031 = vmatprep.subr.mxu0 0.0
    %2032 = vmatpush1.msra.mxu0 0.0
    %2033 = vmatprep.subr.mxu0 0.0
    %2034 = vmatpush1.msra.mxu0 0.0
    %2035 = vmatprep.subr.mxu0 0.0
    %2036 = vmatpush1.msra.mxu0 0.0
    %2037 = vmatprep.subr.mxu0 0.0
    %2038 = vmatpush1.msra.mxu0 0.0
    %2039 = vmatprep.subr.mxu0 0.0
    %2040 = vmatpush1.msra.mxu0 0.0
    %2041 = vmatprep.subr.mxu0 0.0
    %2042 = vmatpush1.msra.mxu0 0.0
    %2043 = vmatprep.subr.mxu0 0.0
    %2044 = vmatpush1.msra.mxu0 0.0
    %2045 = vmatprep.subr.mxu0 0.0
    %2046 = vmatpush1.msra.mxu0 0.0
    %2047 = vmatprep.subr.mxu0 0.0
    %2048 = vmatpush1.msra.mxu0 0.0
    %2049 = vmatprep.subr.mxu0 0.0
    %2050 = vmatpush1.msra.mxu0 0.0
    %2051 = vmatprep.subr.mxu0 0.0
    %2052 = vmatpush1.msra.mxu0 0.0
    %2053 = vmatprep.subr.mxu0 0.0
    %2054 = vmatpush1.msra.mxu0 0.0
    %2055 = vmatprep.mubr.f32.mxu0 0.0
    %v2056 = vand.u32 %v1397, 4294901760
    %2057 = vmatmul.mubr.f32.gmra.mrb[0].mxu0 %v2056
    %v2058 = vpop.f32.mrb[0].mxu0
    %v2059 = vadd.f32 %v1972, %v2058
    %v2060 = vpop.f32.mrb[0].mxu0
    %2061 = vdwg.mxu0
    %2062 = vst [vmem:[%s7] sm:$0xff] %v2059
    // Predicated region
    $region42: #{neural_net_forward.1} parent=1 // pred_check
      _
    $region43: #{neural_net_forward.1} parent=1 // pred_check_branch
      %2064 = sbr.rel (0) target = $region45
    $region44: #{neural_net_forward.1} parent=1 // pred_region
      _
    $region45: #{neural_net_forward.1} parent=1 // pred_fallthru
      _
    // Predicated region
    $region46: #{neural_net_forward.1} parent=1 // pred_check
      _
    $region47: #{neural_net_forward.1} parent=1 // pred_check_branch
      %2066 = sbr.rel (0) target = $region49
    $region48: #{neural_net_forward.1} parent=1 // pred_region
      _
    $region49: #{neural_net_forward.1} parent=1 // pred_fallthru
      _
    %2067 = vsyncpa [#allocation3], 1
    %2068 = vsyncpa [#allocation5], 1

</llo_original>
